<compile_context>
chip_gen: v5e
topology: v5e:2x2
jax: 0.10.0
libtpu: 0.0.40
codegen_flags: <defaults>
</compile_context>

<pallas_src>
import functools
import numpy as np

import jax
import jax.numpy as jnp
from jax.experimental import pallas as pl
from jax.experimental.pallas import tpu as pltpu

BN_EPS = 1e-5
LANE = 128  # pad feature dims to multiples of the 128-lane vreg width


def _round_up(x, m):
    return ((x + m - 1) // m) * m


def generate_layer_dims(first_layer_dim, num_layers):
    assert first_layer_dim % 4 == 0, "First layer dimension must be a multiple of 4."
    assert num_layers >= 1, "Number of layers must be at least 1."
    if num_layers == 1:
        return [first_layer_dim]
    last_layer_dim = first_layer_dim // 4
    layer_dims = np.linspace(first_layer_dim, last_layer_dim, num_layers)
    layer_dims = np.round(layer_dims / 4) * 4
    return layer_dims.astype(int).tolist()


# ----------------------------------------------------------------------------
# Kernel: one batch tile through all (BN-folded) layers.
# refs layout: W_0, b_0, W_1, b_1, ..., W_{L-1}, b_{L-1}, out_ref
# W_i: [in_pad, out_pad] bf16 (pre-transposed, BN folded, zero-padded)
# b_i: [1, out_pad] f32
# ----------------------------------------------------------------------------
def _mlp_kernel(num_layers, x_ref, *refs):
    out_ref = refs[-1]
    h = x_ref[...].astype(jnp.float32)
    for i in range(num_layers):
        w = refs[2 * i][...]          # bf16 weights -> MXU-native throughput
        b = refs[2 * i + 1][...]      # f32 bias
        h = jnp.dot(h.astype(w.dtype), w, preferred_element_type=jnp.float32) + b
        if i < num_layers - 1:        # hidden layers: ReLU (dropout = identity, eval)
            h = jnp.maximum(h, 0.0)
    out_ref[...] = h.astype(out_ref.dtype)


# ----------------------------------------------------------------------------
# One-time parameter prep: fold BN, zero-pad feature dims to 128, cast W->bf16.
# raw params layout (f32, unpadded, W pre-transposed [in, out]):
#   per hidden layer: W, b, [gamma, beta, running_mean, running_var]
#   final layer:      W, b
# ----------------------------------------------------------------------------
def prepare_params(raw_params, num_hidden, batch_norm):
    per = 6 if batch_norm else 2
    folded = []
    idx = 0
    for _ in range(num_hidden):
        if batch_norm:
            W, b, gamma, beta, mean, var = raw_params[idx:idx + per]
            scale = gamma * jax.lax.rsqrt(var + BN_EPS)        # (1, out)
            Wf = W * scale                                     # broadcast over rows
            bf = (b - mean) * scale + beta
        else:
            W, b = raw_params[idx:idx + per]
            Wf, bf = W, b
        idx += per
        folded.append((Wf, bf))
    folded.append((raw_params[idx], raw_params[idx + 1]))      # final Linear (no BN)

    out = []
    for Wf, bf in folded:
        in_d, out_d = Wf.shape
        in_p, out_p = _round_up(in_d, LANE), _round_up(out_d, LANE)
        # Zero padding keeps padded lanes inert through bias / ReLU / next matmul.
        Wp = jnp.zeros((in_p, out_p), jnp.float32).at[:in_d, :out_d].set(Wf)
        bp = jnp.zeros((1, out_p), jnp.float32).at[:, :out_d].set(bf)
        out.extend([Wp.astype(jnp.bfloat16), bp])
    return out


# ----------------------------------------------------------------------------
# Wrapper: batch tiling + padding, BlockSpecs, pallas_call.
# ----------------------------------------------------------------------------
def dynamic_mlp_forward(x, params, *, output_dim, tile_b=128):
    """x: [B, num_features] f32.  params: output of prepare_params."""
    B, F = x.shape
    num_layers = len(params) // 2
    F_pad = params[0].shape[0]
    out_pad = params[-1].shape[1]

    # Don't over-pad tiny batches; otherwise use the requested (large) tile.
    tile_b = min(tile_b, _round_up(B, 8))
    pB = _round_up(B, tile_b)

    x_p = x
    if pB != B or F_pad != F:
        x_p = jnp.zeros((pB, F_pad), x.dtype).at[:B, :F].set(x)

    def build(param_pipeline_mode):
        in_specs = [pl.BlockSpec((tile_b, F_pad), lambda i: (i, 0))]
        for p in params:
            # NOTE: bind p.ndim via default arg (late-binding closure fix).
            in_specs.append(
                pl.BlockSpec(p.shape, lambda i, nd=p.ndim: (0,) * nd,
                             pipeline_mode=param_pipeline_mode))
        out_spec = pl.BlockSpec((tile_b, out_pad), lambda i: (i, 0))
        return pl.pallas_call(
            functools.partial(_mlp_kernel, num_layers),
            out_shape=jax.ShapeDtypeStruct((pB, out_pad), jnp.float32),
            grid_spec=pltpu.PrefetchScalarGridSpec(
                num_scalar_prefetch=0,
                grid=(pB // tile_b,),
                in_specs=in_specs,
                out_specs=out_spec,
            ),
            compiler_params=pltpu.CompilerParams(
                dimension_semantics=("parallel",),   # batch tiles shard across TCs (v7x)
                vmem_limit_bytes=64 * 1024 * 1024,
            ),
        )

    try:
        # Parameters are grid-invariant -> single-buffer them to halve param VMEM.
        out_padded = build(pl.Buffered(1))(x_p, *params)
    except Exception:
        # Fallback: default double-buffering if this JAX/Mosaic build rejects
        # single-buffered pipeline_mode.
        out_padded = build(None)(x_p, *params)

    return out_padded[:B, :output_dim]


# ----------------------------------------------------------------------------
# Synthetic parameter init (PyTorch-module-consistent shapes) + f32 reference.
# ----------------------------------------------------------------------------
def init_params(key, num_features, first_layer_dim, num_layers, output_dim, batch_norm):
    layer_dims = generate_layer_dims(first_layer_dim, num_layers)
    params = []
    in_dim = num_features
    for out_dim in layer_dims:
        key, kw, kb, kg, kbe, km, kv = jax.random.split(key, 7)
        bound = 1.0 / np.sqrt(in_dim)
        W = jax.random.uniform(kw, (in_dim, out_dim), jnp.float32, -bound, bound)  # pre-transposed
        b = jax.random.uniform(kb, (1, out_dim), jnp.float32, -bound, bound)
        params += [W, b]
        if batch_norm:
            gamma = 1.0 + 0.1 * jax.random.normal(kg, (1, out_dim), jnp.float32)
            beta = 0.1 * jax.random.normal(kbe, (1, out_dim), jnp.float32)
            running_mean = 0.1 * jax.random.normal(km, (1, out_dim), jnp.float32)
            running_var = 0.5 + jnp.abs(jax.random.normal(kv, (1, out_dim), jnp.float32))
            params += [gamma, beta, running_mean, running_var]
        in_dim = out_dim
    key, kw, kb = jax.random.split(key, 3)
    bound = 1.0 / np.sqrt(in_dim)
    W = jax.random.uniform(kw, (in_dim, output_dim), jnp.float32, -bound, bound)
    b = jax.random.uniform(kb, (1, output_dim), jnp.float32, -bound, bound)
    params += [W, b]
    return params, layer_dims


def reference_forward(x, raw_params, num_hidden, batch_norm):
    """Pure-JAX f32 reference mirroring the eval-mode PyTorch forward."""
    per = 6 if batch_norm else 2
    h = x
    idx = 0
    for _ in range(num_hidden):
        if batch_norm:
            W, b, gamma, beta, mean, var = raw_params[idx:idx + per]
        else:
            W, b = raw_params[idx:idx + per]
        idx += per
        h = h @ W + b
        if batch_norm:
            h = (h - mean) / jnp.sqrt(var + BN_EPS) * gamma + beta
        h = jnp.maximum(h, 0.0)
    W_f, b_f = raw_params[idx], raw_params[idx + 1]
    return h @ W_f + b_f


if __name__ == "__main__":
    # Module-consistent config (hidden dims -> [32, 20, 8]); batch sized so the
    # grid has 2 steps of tile_b=128 (keeps both v7x TensorCores busy).
    num_features = 32
    first_layer_dim = 32
    num_layers = 3
    output_dim = 8
    batch_norm = True
    dropout_prob = 0.5      # identity in eval mode
    B = 256

    key = jax.random.PRNGKey(0)
    key, kx = jax.random.split(key)
    x = jax.random.normal(kx, (B, num_features), jnp.float32)

    raw_params, layer_dims = init_params(
        key, num_features, first_layer_dim, num_layers, output_dim, batch_norm)

    # One-time prep: fold BN, pad feature dims to 128, cast weights to bf16.
    params = prepare_params(raw_params, len(layer_dims), batch_norm)
    params = jax.block_until_ready(params)

    out = dynamic_mlp_forward(x, params, output_dim=output_dim, tile_b=128)
    out = jax.block_until_ready(out)

    ref = reference_forward(x, raw_params, len(layer_dims), batch_norm)
    # bf16 weights + bf16 activation cast at the matmul boundary -> loose-ish tol.
    np.testing.assert_allclose(np.asarray(out), np.asarray(ref), rtol=2e-2, atol=2e-2)

    print("KERNEL_OK")
</pallas_src>

<mosaic_0001>
module attributes {stable_mosaic.version = 11 : i64} {
  func.func @_mlp_kernel(%arg0: i32, %arg1: memref<128x128xf32, #tpu.memory_space<vmem>>, %arg2: memref<128x128xbf16, #tpu.memory_space<vmem>>, %arg3: memref<1x128xf32, #tpu.memory_space<vmem>>, %arg4: memref<128x128xbf16, #tpu.memory_space<vmem>>, %arg5: memref<1x128xf32, #tpu.memory_space<vmem>>, %arg6: memref<128x128xbf16, #tpu.memory_space<vmem>>, %arg7: memref<1x128xf32, #tpu.memory_space<vmem>>, %arg8: memref<128x128xbf16, #tpu.memory_space<vmem>>, %arg9: memref<1x128xf32, #tpu.memory_space<vmem>>, %arg10: memref<128x128xf32, #tpu.memory_space<vmem>>) attributes {dimension_semantics = [#tpu.dimension_semantics<parallel>], iteration_bounds = array<i64: 2>, scalar_prefetch = 0 : i64, scratch_operands = 0 : i64, tpu.core_type = #tpu.core_type<tc>, window_params = [{transform_indices = @transform_0, window_bounds = array<i64: 128, 128>}, {pipeline_mode = #tpu.pipeline_mode<synchronous>, transform_indices = @transform_1, window_bounds = array<i64: 128, 128>}, {pipeline_mode = #tpu.pipeline_mode<synchronous>, transform_indices = @transform_2, window_bounds = array<i64: 1, 128>}, {pipeline_mode = #tpu.pipeline_mode<synchronous>, transform_indices = @transform_3, window_bounds = array<i64: 128, 128>}, {pipeline_mode = #tpu.pipeline_mode<synchronous>, transform_indices = @transform_4, window_bounds = array<i64: 1, 128>}, {pipeline_mode = #tpu.pipeline_mode<synchronous>, transform_indices = @transform_5, window_bounds = array<i64: 128, 128>}, {pipeline_mode = #tpu.pipeline_mode<synchronous>, transform_indices = @transform_6, window_bounds = array<i64: 1, 128>}, {pipeline_mode = #tpu.pipeline_mode<synchronous>, transform_indices = @transform_7, window_bounds = array<i64: 128, 128>}, {pipeline_mode = #tpu.pipeline_mode<synchronous>, transform_indices = @transform_8, window_bounds = array<i64: 1, 128>}, {transform_indices = @transform_9, window_bounds = array<i64: 128, 128>}]} {
    %c0 = arith.constant 0 : index
    %c0_0 = arith.constant 0 : index
    %0 = vector.load %arg1[%c0, %c0_0] : memref<128x128xf32, #tpu.memory_space<vmem>>, vector<128x128xf32>
    %c0_1 = arith.constant 0 : index
    %c0_2 = arith.constant 0 : index
    %1 = vector.load %arg2[%c0_1, %c0_2] : memref<128x128xbf16, #tpu.memory_space<vmem>>, vector<128x128xbf16>
    %c0_3 = arith.constant 0 : index
    %c0_4 = arith.constant 0 : index
    %2 = vector.load %arg3[%c0_3, %c0_4] : memref<1x128xf32, #tpu.memory_space<vmem>>, vector<1x128xf32>
    %3 = arith.truncf %0 : vector<128x128xf32> to vector<128x128xbf16>
    %cst = arith.constant dense<0.000000e+00> : vector<128x128xf32>
    %4 = tpu.matmul %3, %1, %cst {dimension_numbers = #tpu.dot_dimension_numbers<[1], [0], [0], [1], [0, 0, 1, 1], [], []>} : vector<128x128xbf16>, vector<128x128xbf16>, vector<128x128xf32> -> vector<128x128xf32>
    %5 = vector.broadcast %2 : vector<1x128xf32> to vector<128x128xf32>
    %6 = arith.addf %4, %5 : vector<128x128xf32>
    %cst_5 = arith.constant 0.000000e+00 : f32
    %7 = vector.broadcast %cst_5 : f32 to vector<128x128xf32>
    %8 = arith.maximumf %6, %7 : vector<128x128xf32>
    %c0_6 = arith.constant 0 : index
    %c0_7 = arith.constant 0 : index
    %9 = vector.load %arg4[%c0_6, %c0_7] : memref<128x128xbf16, #tpu.memory_space<vmem>>, vector<128x128xbf16>
    %c0_8 = arith.constant 0 : index
    %c0_9 = arith.constant 0 : index
    %10 = vector.load %arg5[%c0_8, %c0_9] : memref<1x128xf32, #tpu.memory_space<vmem>>, vector<1x128xf32>
    %11 = arith.truncf %8 : vector<128x128xf32> to vector<128x128xbf16>
    %cst_10 = arith.constant dense<0.000000e+00> : vector<128x128xf32>
    %12 = tpu.matmul %11, %9, %cst_10 {dimension_numbers = #tpu.dot_dimension_numbers<[1], [0], [0], [1], [0, 0, 1, 1], [], []>} : vector<128x128xbf16>, vector<128x128xbf16>, vector<128x128xf32> -> vector<128x128xf32>
    %13 = vector.broadcast %10 : vector<1x128xf32> to vector<128x128xf32>
    %14 = arith.addf %12, %13 : vector<128x128xf32>
    %cst_11 = arith.constant 0.000000e+00 : f32
    %15 = vector.broadcast %cst_11 : f32 to vector<128x128xf32>
    %16 = arith.maximumf %14, %15 : vector<128x128xf32>
    %c0_12 = arith.constant 0 : index
    %c0_13 = arith.constant 0 : index
    %17 = vector.load %arg6[%c0_12, %c0_13] : memref<128x128xbf16, #tpu.memory_space<vmem>>, vector<128x128xbf16>
    %c0_14 = arith.constant 0 : index
    %c0_15 = arith.constant 0 : index
    %18 = vector.load %arg7[%c0_14, %c0_15] : memref<1x128xf32, #tpu.memory_space<vmem>>, vector<1x128xf32>
    %19 = arith.truncf %16 : vector<128x128xf32> to vector<128x128xbf16>
    %cst_16 = arith.constant dense<0.000000e+00> : vector<128x128xf32>
    %20 = tpu.matmul %19, %17, %cst_16 {dimension_numbers = #tpu.dot_dimension_numbers<[1], [0], [0], [1], [0, 0, 1, 1], [], []>} : vector<128x128xbf16>, vector<128x128xbf16>, vector<128x128xf32> -> vector<128x128xf32>
    %21 = vector.broadcast %18 : vector<1x128xf32> to vector<128x128xf32>
    %22 = arith.addf %20, %21 : vector<128x128xf32>
    %cst_17 = arith.constant 0.000000e+00 : f32
    %23 = vector.broadcast %cst_17 : f32 to vector<128x128xf32>
    %24 = arith.maximumf %22, %23 : vector<128x128xf32>
    %c0_18 = arith.constant 0 : index
    %c0_19 = arith.constant 0 : index
    %25 = vector.load %arg8[%c0_18, %c0_19] : memref<128x128xbf16, #tpu.memory_space<vmem>>, vector<128x128xbf16>
    %c0_20 = arith.constant 0 : index
    %c0_21 = arith.constant 0 : index
    %26 = vector.load %arg9[%c0_20, %c0_21] : memref<1x128xf32, #tpu.memory_space<vmem>>, vector<1x128xf32>
    %27 = arith.truncf %24 : vector<128x128xf32> to vector<128x128xbf16>
    %cst_22 = arith.constant dense<0.000000e+00> : vector<128x128xf32>
    %28 = tpu.matmul %27, %25, %cst_22 {dimension_numbers = #tpu.dot_dimension_numbers<[1], [0], [0], [1], [0, 0, 1, 1], [], []>} : vector<128x128xbf16>, vector<128x128xbf16>, vector<128x128xf32> -> vector<128x128xf32>
    %29 = vector.broadcast %26 : vector<1x128xf32> to vector<128x128xf32>
    %30 = arith.addf %28, %29 : vector<128x128xf32>
    %c0_23 = arith.constant 0 : index
    %c0_24 = arith.constant 0 : index
    %31 = vector.load %arg10[%c0_23, %c0_24] : memref<128x128xf32, #tpu.memory_space<vmem>>, vector<128x128xf32>
    tpu.vector_store %arg10[%c0_23, %c0_24], %30 {strides = array<i32>} : memref<128x128xf32, #tpu.memory_space<vmem>>, vector<128x128xf32>,
    return
  }
  func.func @transform_0(%arg0: i32) -> (i32, i32) {
    %c0_i32 = arith.constant 0 : i32
    %c0_i32_0 = arith.constant 0 : i32
    return %arg0, %c0_i32 : i32, i32
  }
  func.func @transform_1(%arg0: i32) -> (i32, i32) {
    %c0_i32 = arith.constant 0 : i32
    %c0_i32_0 = arith.constant 0 : i32
    %c0_i32_1 = arith.constant 0 : i32
    return %c0_i32, %c0_i32_0 : i32, i32
  }
  func.func @transform_2(%arg0: i32) -> (i32, i32) {
    %c0_i32 = arith.constant 0 : i32
    %c0_i32_0 = arith.constant 0 : i32
    %c0_i32_1 = arith.constant 0 : i32
    return %c0_i32, %c0_i32_0 : i32, i32
  }
  func.func @transform_3(%arg0: i32) -> (i32, i32) {
    %c0_i32 = arith.constant 0 : i32
    %c0_i32_0 = arith.constant 0 : i32
    %c0_i32_1 = arith.constant 0 : i32
    return %c0_i32, %c0_i32_0 : i32, i32
  }
  func.func @transform_4(%arg0: i32) -> (i32, i32) {
    %c0_i32 = arith.constant 0 : i32
    %c0_i32_0 = arith.constant 0 : i32
    %c0_i32_1 = arith.constant 0 : i32
    return %c0_i32, %c0_i32_0 : i32, i32
  }
  func.func @transform_5(%arg0: i32) -> (i32, i32) {
    %c0_i32 = arith.constant 0 : i32
    %c0_i32_0 = arith.constant 0 : i32
    %c0_i32_1 = arith.constant 0 : i32
    return %c0_i32, %c0_i32_0 : i32, i32
  }
  func.func @transform_6(%arg0: i32) -> (i32, i32) {
    %c0_i32 = arith.constant 0 : i32
    %c0_i32_0 = arith.constant 0 : i32
    %c0_i32_1 = arith.constant 0 : i32
    return %c0_i32, %c0_i32_0 : i32, i32
  }
  func.func @transform_7(%arg0: i32) -> (i32, i32) {
    %c0_i32 = arith.constant 0 : i32
    %c0_i32_0 = arith.constant 0 : i32
    %c0_i32_1 = arith.constant 0 : i32
    return %c0_i32, %c0_i32_0 : i32, i32
  }
  func.func @transform_8(%arg0: i32) -> (i32, i32) {
    %c0_i32 = arith.constant 0 : i32
    %c0_i32_0 = arith.constant 0 : i32
    %c0_i32_1 = arith.constant 0 : i32
    return %c0_i32, %c0_i32_0 : i32, i32
  }
  func.func @transform_9(%arg0: i32) -> (i32, i32) {
    %c0_i32 = arith.constant 0 : i32
    %c0_i32_0 = arith.constant 0 : i32
    return %arg0, %c0_i32 : i32, i32
  }
}

module attributes {stable_mosaic.version = 11 : i64} {
  func.func @_mlp_kernel(%arg0: i32, %arg1: memref<128x128xf32, #tpu.memory_space<vmem>>, %arg2: memref<128x128xbf16, #tpu.memory_space<vmem>>, %arg3: memref<1x128xf32, #tpu.memory_space<vmem>>, %arg4: memref<128x128xbf16, #tpu.memory_space<vmem>>, %arg5: memref<1x128xf32, #tpu.memory_space<vmem>>, %arg6: memref<128x128xbf16, #tpu.memory_space<vmem>>, %arg7: memref<1x128xf32, #tpu.memory_space<vmem>>, %arg8: memref<128x128xbf16, #tpu.memory_space<vmem>>, %arg9: memref<1x128xf32, #tpu.memory_space<vmem>>, %arg10: memref<128x128xf32, #tpu.memory_space<vmem>>) attributes {dimension_semantics = [#tpu.dimension_semantics<parallel>], iteration_bounds = array<i64: 2>, scalar_prefetch = 0 : i64, scratch_operands = 0 : i64, tpu.core_type = #tpu.core_type<tc>, window_params = [{transform_indices = @transform_0, window_bounds = array<i64: 128, 128>}, {pipeline_mode = #tpu.pipeline_mode<synchronous>, transform_indices = @transform_1, window_bounds = array<i64: 128, 128>}, {pipeline_mode = #tpu.pipeline_mode<synchronous>, transform_indices = @transform_2, window_bounds = array<i64: 1, 128>}, {pipeline_mode = #tpu.pipeline_mode<synchronous>, transform_indices = @transform_3, window_bounds = array<i64: 128, 128>}, {pipeline_mode = #tpu.pipeline_mode<synchronous>, transform_indices = @transform_4, window_bounds = array<i64: 1, 128>}, {pipeline_mode = #tpu.pipeline_mode<synchronous>, transform_indices = @transform_5, window_bounds = array<i64: 128, 128>}, {pipeline_mode = #tpu.pipeline_mode<synchronous>, transform_indices = @transform_6, window_bounds = array<i64: 1, 128>}, {pipeline_mode = #tpu.pipeline_mode<synchronous>, transform_indices = @transform_7, window_bounds = array<i64: 128, 128>}, {pipeline_mode = #tpu.pipeline_mode<synchronous>, transform_indices = @transform_8, window_bounds = array<i64: 1, 128>}, {transform_indices = @transform_9, window_bounds = array<i64: 128, 128>}]} {
    %c0 = arith.constant 0 : index
    %c0_0 = arith.constant 0 : index
    %0 = vector.load %arg1[%c0, %c0_0] : memref<128x128xf32, #tpu.memory_space<vmem>>, vector<128x128xf32>
    %c0_1 = arith.constant 0 : index
    %c0_2 = arith.constant 0 : index
    %1 = vector.load %arg2[%c0_1, %c0_2] : memref<128x128xbf16, #tpu.memory_space<vmem>>, vector<128x128xbf16>
    %c0_3 = arith.constant 0 : index
    %c0_4 = arith.constant 0 : index
    %2 = vector.load %arg3[%c0_3, %c0_4] : memref<1x128xf32, #tpu.memory_space<vmem>>, vector<1x128xf32>
    %3 = arith.truncf %0 : vector<128x128xf32> to vector<128x128xbf16>
    %cst = arith.constant dense<0.000000e+00> : vector<128x128xf32>
    %4 = tpu.matmul %3, %1, %cst {dimension_numbers = #tpu.dot_dimension_numbers<[1], [0], [0], [1], [0, 0, 1, 1], [], []>} : vector<128x128xbf16>, vector<128x128xbf16>, vector<128x128xf32> -> vector<128x128xf32>
    %5 = vector.broadcast %2 : vector<1x128xf32> to vector<128x128xf32>
    %6 = arith.addf %4, %5 : vector<128x128xf32>
    %cst_5 = arith.constant 0.000000e+00 : f32
    %7 = vector.broadcast %cst_5 : f32 to vector<128x128xf32>
    %8 = arith.maximumf %6, %7 : vector<128x128xf32>
    %c0_6 = arith.constant 0 : index
    %c0_7 = arith.constant 0 : index
    %9 = vector.load %arg4[%c0_6, %c0_7] : memref<128x128xbf16, #tpu.memory_space<vmem>>, vector<128x128xbf16>
    %c0_8 = arith.constant 0 : index
    %c0_9 = arith.constant 0 : index
    %10 = vector.load %arg5[%c0_8, %c0_9] : memref<1x128xf32, #tpu.memory_space<vmem>>, vector<1x128xf32>
    %11 = arith.truncf %8 : vector<128x128xf32> to vector<128x128xbf16>
    %cst_10 = arith.constant dense<0.000000e+00> : vector<128x128xf32>
    %12 = tpu.matmul %11, %9, %cst_10 {dimension_numbers = #tpu.dot_dimension_numbers<[1], [0], [0], [1], [0, 0, 1, 1], [], []>} : vector<128x128xbf16>, vector<128x128xbf16>, vector<128x128xf32> -> vector<128x128xf32>
    %13 = vector.broadcast %10 : vector<1x128xf32> to vector<128x128xf32>
    %14 = arith.addf %12, %13 : vector<128x128xf32>
    %cst_11 = arith.constant 0.000000e+00 : f32
    %15 = vector.broadcast %cst_11 : f32 to vector<128x128xf32>
    %16 = arith.maximumf %14, %15 : vector<128x128xf32>
    %c0_12 = arith.constant 0 : index
    %c0_13 = arith.constant 0 : index
    %17 = vector.load %arg6[%c0_12, %c0_13] : memref<128x128xbf16, #tpu.memory_space<vmem>>, vector<128x128xbf16>
    %c0_14 = arith.constant 0 : index
    %c0_15 = arith.constant 0 : index
    %18 = vector.load %arg7[%c0_14, %c0_15] : memref<1x128xf32, #tpu.memory_space<vmem>>, vector<1x128xf32>
    %19 = arith.truncf %16 : vector<128x128xf32> to vector<128x128xbf16>
    %cst_16 = arith.constant dense<0.000000e+00> : vector<128x128xf32>
    %20 = tpu.matmul %19, %17, %cst_16 {dimension_numbers = #tpu.dot_dimension_numbers<[1], [0], [0], [1], [0, 0, 1, 1], [], []>} : vector<128x128xbf16>, vector<128x128xbf16>, vector<128x128xf32> -> vector<128x128xf32>
    %21 = vector.broadcast %18 : vector<1x128xf32> to vector<128x128xf32>
    %22 = arith.addf %20, %21 : vector<128x128xf32>
    %cst_17 = arith.constant 0.000000e+00 : f32
    %23 = vector.broadcast %cst_17 : f32 to vector<128x128xf32>
    %24 = arith.maximumf %22, %23 : vector<128x128xf32>
    %c0_18 = arith.constant 0 : index
    %c0_19 = arith.constant 0 : index
    %25 = vector.load %arg8[%c0_18, %c0_19] : memref<128x128xbf16, #tpu.memory_space<vmem>>, vector<128x128xbf16>
    %c0_20 = arith.constant 0 : index
    %c0_21 = arith.constant 0 : index
    %26 = vector.load %arg9[%c0_20, %c0_21] : memref<1x128xf32, #tpu.memory_space<vmem>>, vector<1x128xf32>
    %27 = arith.truncf %24 : vector<128x128xf32> to vector<128x128xbf16>
    %cst_22 = arith.constant dense<0.000000e+00> : vector<128x128xf32>
    %28 = tpu.matmul %27, %25, %cst_22 {dimension_numbers = #tpu.dot_dimension_numbers<[1], [0], [0], [1], [0, 0, 1, 1], [], []>} : vector<128x128xbf16>, vector<128x128xbf16>, vector<128x128xf32> -> vector<128x128xf32>
    %29 = vector.broadcast %26 : vector<1x128xf32> to vector<128x128xf32>
    %30 = arith.addf %28, %29 : vector<128x128xf32>
    %c0_23 = arith.constant 0 : index
    %c0_24 = arith.constant 0 : index
    %31 = vector.load %arg10[%c0_23, %c0_24] : memref<128x128xf32, #tpu.memory_space<vmem>>, vector<128x128xf32>
    tpu.vector_store %arg10[%c0_23, %c0_24], %30 {strides = array<i32>} : memref<128x128xf32, #tpu.memory_space<vmem>>, vector<128x128xf32>,
    return
  }
  func.func @transform_0(%arg0: i32) -> (i32, i32) {
    %c0_i32 = arith.constant 0 : i32
    %c0_i32_0 = arith.constant 0 : i32
    return %arg0, %c0_i32 : i32, i32
  }
  func.func @transform_1(%arg0: i32) -> (i32, i32) {
    %c0_i32 = arith.constant 0 : i32
    %c0_i32_0 = arith.constant 0 : i32
    %c0_i32_1 = arith.constant 0 : i32
    return %c0_i32, %c0_i32_0 : i32, i32
  }
  func.func @transform_2(%arg0: i32) -> (i32, i32) {
    %c0_i32 = arith.constant 0 : i32
    %c0_i32_0 = arith.constant 0 : i32
    %c0_i32_1 = arith.constant 0 : i32
    return %c0_i32, %c0_i32_0 : i32, i32
  }
  func.func @transform_3(%arg0: i32) -> (i32, i32) {
    %c0_i32 = arith.constant 0 : i32
    %c0_i32_0 = arith.constant 0 : i32
    %c0_i32_1 = arith.constant 0 : i32
    return %c0_i32, %c0_i32_0 : i32, i32
  }
  func.func @transform_4(%arg0: i32) -> (i32, i32) {
    %c0_i32 = arith.constant 0 : i32
    %c0_i32_0 = arith.constant 0 : i32
    %c0_i32_1 = arith.constant 0 : i32
    return %c0_i32, %c0_i32_0 : i32, i32
  }
  func.func @transform_5(%arg0: i32) -> (i32, i32) {
    %c0_i32 = arith.constant 0 : i32
    %c0_i32_0 = arith.constant 0 : i32
    %c0_i32_1 = arith.constant 0 : i32
    return %c0_i32, %c0_i32_0 : i32, i32
  }
  func.func @transform_6(%arg0: i32) -> (i32, i32) {
    %c0_i32 = arith.constant 0 : i32
    %c0_i32_0 = arith.constant 0 : i32
    %c0_i32_1 = arith.constant 0 : i32
    return %c0_i32, %c0_i32_0 : i32, i32
  }
  func.func @transform_7(%arg0: i32) -> (i32, i32) {
    %c0_i32 = arith.constant 0 : i32
    %c0_i32_0 = arith.constant 0 : i32
    %c0_i32_1 = arith.constant 0 : i32
    return %c0_i32, %c0_i32_0 : i32, i32
  }
  func.func @transform_8(%arg0: i32) -> (i32, i32) {
    %c0_i32 = arith.constant 0 : i32
    %c0_i32_0 = arith.constant 0 : i32
    %c0_i32_1 = arith.constant 0 : i32
    return %c0_i32, %c0_i32_0 : i32, i32
  }
  func.func @transform_9(%arg0: i32) -> (i32, i32) {
    %c0_i32 = arith.constant 0 : i32
    %c0_i32_0 = arith.constant 0 : i32
    return %arg0, %c0_i32 : i32, i32
  }
}

</mosaic_0001>

<llo_original>
// kernel: tpu_custom_call.1
$region0: #{tpu_custom_call.1}
  #allocation0 [shape = 'u32[]', space=smem, size = 0x4, offset = 0x4, fixed_abs, tag = 'smem constant byte address 0x4 - core index']
  #allocation1 [shape = 'u32[72,128]{1,0:T(1,128)}', space=vmem, size = 0x9000, scoped, tag = 'internal scratch']
  %s0 = inlined_call_operand.hbm [shape: f32[256,128], index: 0, kind: input, shape index: {}]
  %s1 = inlined_call_operand.hbm [shape: bf16[128,128], index: 1, kind: input, shape index: {}]
  %s2 = inlined_call_operand.vmem [shape: f32[1,128], index: 2, kind: input, shape index: {}]
  %s3 = inlined_call_operand.hbm [shape: bf16[128,128], index: 3, kind: input, shape index: {}]
  %s4 = inlined_call_operand.vmem [shape: f32[1,128], index: 4, kind: input, shape index: {}]
  %s5 = inlined_call_operand.hbm [shape: bf16[128,128], index: 5, kind: input, shape index: {}]
  %s6 = inlined_call_operand.vmem [shape: f32[1,128], index: 6, kind: input, shape index: {}]
  %s7 = inlined_call_operand.hbm [shape: bf16[128,128], index: 7, kind: input, shape index: {}]
  %s8 = inlined_call_operand.vmem [shape: f32[1,128], index: 8, kind: input, shape index: {}]
  %s9 = inlined_call_operand.hbm [shape: f32[256,128], index: 9, kind: output, shape index: {}]
  %s10 = sld [smem:[#allocation0]]
  $region89: #{tpu_custom_call.1} parent=0
    _
  %s12 = ssub.s32 1, %s10
  %s13 = scalar_select 0, %s12, %s10
  $region1: #{tpu_custom_call.1} parent=0
    #allocation2 [shape = 'u8[131072]{0}', space=vmem, size = 0x20000, scoped, tag = 'input window, operand 0']
    #allocation3 [shape = 's32[2]{0}', space=sflag, size = 0x8, scoped, tag = 'scoped memory for tpu_custom_call.1']
    #allocation4 [shape = 's32[2]{0}', space=sflag, size = 0x8, scoped, tag = 'scoped memory for tpu_custom_call.1']
    #allocation5 [shape = 'u8[32768]{0}', space=vmem, size = 0x8000, scoped, tag = 'input window, operand 1, single buffered']
    #allocation6 [shape = 's32[1]{0}', space=sflag, size = 0x4, scoped, tag = 'scoped memory for tpu_custom_call.1']
    #allocation7 [shape = 'u8[32768]{0}', space=vmem, size = 0x8000, scoped, tag = 'input window, operand 3, single buffered']
    #allocation8 [shape = 'u8[32768]{0}', space=vmem, size = 0x8000, scoped, tag = 'input window, operand 5, single buffered']
    #allocation9 [shape = 's32[1]{0}', space=sflag, size = 0x4, scoped, tag = 'scoped memory for tpu_custom_call.1']
    #allocation10 [shape = 'u8[32768]{0}', space=vmem, size = 0x8000, scoped, tag = 'input window, operand 7, single buffered']
    #allocation11 [shape = 'u8[131072]{0}', space=vmem, size = 0x20000, scoped, tag = 'output window, operand 0']
    %14 = vsyncpa [#allocation3], 0
    %s15 = scalar_lea.sflag [#allocation3], 1
    %16 = vsyncpa %s15, 0
    %17 = vsyncpa [#allocation6], 0
    %18 = vsyncpa [#allocation9], 0
    %19 = vsyncpa [#allocation4], 0
    %s20 = scalar_lea.sflag [#allocation4], 1
    %21 = vsyncpa %s20, 0
    loop: start=0, step=1, limit=4
    $region2: #{tpu_custom_call.1} parent=1 // loop_pre_header
      _
    $region3: #{tpu_custom_call.1} parent=1 // loop_header
      %s23 = sphi 0, %s27
      %p24 = scmp.ge.s32.totalorder %s23, 4
      %s33 = sphi 0, %s35
      %s36 = sphi 0, %s33
      %s37 = sphi 0, %s36
      %s53 = sphi 0, %s37
      %s57 = sphi 0, %s57
      %s59 = sphi 0, %s57
      %s60 = sphi 0, %s59
      %s74 = sphi 0, %s60
      %s78 = sphi 0, %s78
      %s80 = sphi 0, %s78
      %s81 = sphi 0, %s80
      %s95 = sphi 0, %s81
      %s99 = sphi 0, %s99
      %s101 = sphi 0, %s99
      %s102 = sphi 0, %s101
      %s116 = sphi 0, %s102
      %s120 = sphi 0, %s120
      %s122 = sphi 0, %s120
      %s123 = sphi 0, %s122
      %s137 = sphi 0, %s123
      %s141 = sphi 0, %s141
      %s143 = sphi 0, %s141
      %s144 = sphi 0, %s143
      %s158 = sphi 0, %s144
      %s162 = sphi 0, %s162
      %s164 = sphi 0, %s162
      %s165 = sphi 0, %s164
      %s179 = sphi 0, %s165
      %s183 = sphi 0, %s183
      %s185 = sphi 0, %s183
      %s186 = sphi 0, %s185
      %s200 = sphi 0, %s186
      %s204 = sphi 0, %s204
      %s206 = sphi 0, %s204
      %s207 = sphi 0, %s206
      %s221 = sphi 0, %s207
      %s227 = sphi 0, %s229
      %s230 = sphi 0, %s227
      %s231 = sphi 0, %s230
      %s247 = sphi 0, %s231
    $region4: #{tpu_custom_call.1} parent=1 // loop_header_branch
      %26 = sbr.rel (%p24) target = $region8
    $region5: #{tpu_custom_call.1} parent=1 // loop_body
      %s28 = ssub.s32 %s23, 1
      %s29 = ssub.s32 %s23, 2
      %s30 = sadd.s32 %s23, 1
      %s31 = ssub.s32 %s23, %s30
      %p32 = scmp.eq.s32.totalorder %s31, 0
      %s34 = sadd.s32 %s33, 1
      %s35 = scalar_select %p32, %s33, %s34
      %p38 = pneg %p32
      %p39 = scmp.eq.s32.totalorder %s23, 1
      %p40 = por %p38, %p39
      %p41 = scmp.ne.s32.totalorder %s33, %s36
      %p42 = scmp.eq.s32.totalorder %s23, 0
      %p43 = por %p41, %p42
      %p44 = scmp.ne.s32.totalorder %s33, %s36
      %p45 = scmp.eq.s32.totalorder %s28, 1
      %p46 = por %p44, %p45
      %p47 = scmp.ne.s32.totalorder %s36, %s37
      %p48 = scmp.eq.s32.totalorder %s28, 0
      %p49 = por %p47, %p48
      %p50 = scmp.ne.s32.totalorder %s36, %s37
      %p51 = scmp.eq.s32.totalorder %s29, 1
      %p52 = por %p50, %p51
      %p54 = scmp.ne.s32.totalorder %s37, %s53
      %p55 = scmp.eq.s32.totalorder %s29, 0
      %p56 = por %p54, %p55
      %s58 = sadd.s32 %s57, 1
      %p61 = scmp.eq.s32.totalorder %s23, 1
      %p62 = scmp.ne.s32.totalorder %s57, %s59
      %p63 = scmp.eq.s32.totalorder %s23, 0
      %p64 = por %p62, %p63
      %p65 = scmp.ne.s32.totalorder %s57, %s59
      %p66 = scmp.eq.s32.totalorder %s28, 1
      %p67 = por %p65, %p66
      %p68 = scmp.ne.s32.totalorder %s59, %s60
      %p69 = scmp.eq.s32.totalorder %s28, 0
      %p70 = por %p68, %p69
      %p71 = scmp.ne.s32.totalorder %s59, %s60
      %p72 = scmp.eq.s32.totalorder %s29, 1
      %p73 = por %p71, %p72
      %p75 = scmp.ne.s32.totalorder %s60, %s74
      %p76 = scmp.eq.s32.totalorder %s29, 0
      %p77 = por %p75, %p76
      %s79 = sadd.s32 %s78, 1
      %p82 = scmp.eq.s32.totalorder %s23, 1
      %p83 = scmp.ne.s32.totalorder %s78, %s80
      %p84 = scmp.eq.s32.totalorder %s23, 0
      %p85 = por %p83, %p84
      %p86 = scmp.ne.s32.totalorder %s78, %s80
      %p87 = scmp.eq.s32.totalorder %s28, 1
      %p88 = por %p86, %p87
      %p89 = scmp.ne.s32.totalorder %s80, %s81
      %p90 = scmp.eq.s32.totalorder %s28, 0
      %p91 = por %p89, %p90
      %p92 = scmp.ne.s32.totalorder %s80, %s81
      %p93 = scmp.eq.s32.totalorder %s29, 1
      %p94 = por %p92, %p93
      %p96 = scmp.ne.s32.totalorder %s81, %s95
      %p97 = scmp.eq.s32.totalorder %s29, 0
      %p98 = por %p96, %p97
      %s100 = sadd.s32 %s99, 1
      %p103 = scmp.eq.s32.totalorder %s23, 1
      %p104 = scmp.ne.s32.totalorder %s99, %s101
      %p105 = scmp.eq.s32.totalorder %s23, 0
      %p106 = por %p104, %p105
      %p107 = scmp.ne.s32.totalorder %s99, %s101
      %p108 = scmp.eq.s32.totalorder %s28, 1
      %p109 = por %p107, %p108
      %p110 = scmp.ne.s32.totalorder %s101, %s102
      %p111 = scmp.eq.s32.totalorder %s28, 0
      %p112 = por %p110, %p111
      %p113 = scmp.ne.s32.totalorder %s101, %s102
      %p114 = scmp.eq.s32.totalorder %s29, 1
      %p115 = por %p113, %p114
      %p117 = scmp.ne.s32.totalorder %s102, %s116
      %p118 = scmp.eq.s32.totalorder %s29, 0
      %p119 = por %p117, %p118
      %s121 = sadd.s32 %s120, 1
      %p124 = scmp.eq.s32.totalorder %s23, 1
      %p125 = scmp.ne.s32.totalorder %s120, %s122
      %p126 = scmp.eq.s32.totalorder %s23, 0
      %p127 = por %p125, %p126
      %p128 = scmp.ne.s32.totalorder %s120, %s122
      %p129 = scmp.eq.s32.totalorder %s28, 1
      %p130 = por %p128, %p129
      %p131 = scmp.ne.s32.totalorder %s122, %s123
      %p132 = scmp.eq.s32.totalorder %s28, 0
      %p133 = por %p131, %p132
      %p134 = scmp.ne.s32.totalorder %s122, %s123
      %p135 = scmp.eq.s32.totalorder %s29, 1
      %p136 = por %p134, %p135
      %p138 = scmp.ne.s32.totalorder %s123, %s137
      %p139 = scmp.eq.s32.totalorder %s29, 0
      %p140 = por %p138, %p139
      %s142 = sadd.s32 %s141, 1
      %p145 = scmp.eq.s32.totalorder %s23, 1
      %p146 = scmp.ne.s32.totalorder %s141, %s143
      %p147 = scmp.eq.s32.totalorder %s23, 0
      %p148 = por %p146, %p147
      %p149 = scmp.ne.s32.totalorder %s141, %s143
      %p150 = scmp.eq.s32.totalorder %s28, 1
      %p151 = por %p149, %p150
      %p152 = scmp.ne.s32.totalorder %s143, %s144
      %p153 = scmp.eq.s32.totalorder %s28, 0
      %p154 = por %p152, %p153
      %p155 = scmp.ne.s32.totalorder %s143, %s144
      %p156 = scmp.eq.s32.totalorder %s29, 1
      %p157 = por %p155, %p156
      %p159 = scmp.ne.s32.totalorder %s144, %s158
      %p160 = scmp.eq.s32.totalorder %s29, 0
      %p161 = por %p159, %p160
      %s163 = sadd.s32 %s162, 1
      %p166 = scmp.eq.s32.totalorder %s23, 1
      %p167 = scmp.ne.s32.totalorder %s162, %s164
      %p168 = scmp.eq.s32.totalorder %s23, 0
      %p169 = por %p167, %p168
      %p170 = scmp.ne.s32.totalorder %s162, %s164
      %p171 = scmp.eq.s32.totalorder %s28, 1
      %p172 = por %p170, %p171
      %p173 = scmp.ne.s32.totalorder %s164, %s165
      %p174 = scmp.eq.s32.totalorder %s28, 0
      %p175 = por %p173, %p174
      %p176 = scmp.ne.s32.totalorder %s164, %s165
      %p177 = scmp.eq.s32.totalorder %s29, 1
      %p178 = por %p176, %p177
      %p180 = scmp.ne.s32.totalorder %s165, %s179
      %p181 = scmp.eq.s32.totalorder %s29, 0
      %p182 = por %p180, %p181
      %s184 = sadd.s32 %s183, 1
      %p187 = scmp.eq.s32.totalorder %s23, 1
      %p188 = scmp.ne.s32.totalorder %s183, %s185
      %p189 = scmp.eq.s32.totalorder %s23, 0
      %p190 = por %p188, %p189
      %p191 = scmp.ne.s32.totalorder %s183, %s185
      %p192 = scmp.eq.s32.totalorder %s28, 1
      %p193 = por %p191, %p192
      %p194 = scmp.ne.s32.totalorder %s185, %s186
      %p195 = scmp.eq.s32.totalorder %s28, 0
      %p196 = por %p194, %p195
      %p197 = scmp.ne.s32.totalorder %s185, %s186
      %p198 = scmp.eq.s32.totalorder %s29, 1
      %p199 = por %p197, %p198
      %p201 = scmp.ne.s32.totalorder %s186, %s200
      %p202 = scmp.eq.s32.totalorder %s29, 0
      %p203 = por %p201, %p202
      %s205 = sadd.s32 %s204, 1
      %p208 = scmp.eq.s32.totalorder %s23, 1
      %p209 = scmp.ne.s32.totalorder %s204, %s206
      %p210 = scmp.eq.s32.totalorder %s23, 0
      %p211 = por %p209, %p210
      %p212 = scmp.ne.s32.totalorder %s204, %s206
      %p213 = scmp.eq.s32.totalorder %s28, 1
      %p214 = por %p212, %p213
      %p215 = scmp.ne.s32.totalorder %s206, %s207
      %p216 = scmp.eq.s32.totalorder %s28, 0
      %p217 = por %p215, %p216
      %p218 = scmp.ne.s32.totalorder %s206, %s207
      %p219 = scmp.eq.s32.totalorder %s29, 1
      %p220 = por %p218, %p219
      %p222 = scmp.ne.s32.totalorder %s207, %s221
      %p223 = scmp.eq.s32.totalorder %s29, 0
      %p224 = por %p222, %p223
      %s225 = ssub.s32 %s23, %s30
      %p226 = scmp.eq.s32.totalorder %s225, 0
      %s228 = sadd.s32 %s227, 1
      %s229 = scalar_select %p226, %s227, %s228
      %p232 = pneg %p226
      %p233 = scmp.eq.s32.totalorder %s23, 1
      %p234 = por %p232, %p233
      %p235 = scmp.ne.s32.totalorder %s227, %s230
      %p236 = scmp.eq.s32.totalorder %s23, 0
      %p237 = por %p235, %p236
      %p238 = scmp.ne.s32.totalorder %s227, %s230
      %p239 = scmp.eq.s32.totalorder %s28, 1
      %p240 = por %p238, %p239
      %p241 = scmp.ne.s32.totalorder %s230, %s231
      %p242 = scmp.eq.s32.totalorder %s28, 0
      %p243 = por %p241, %p242
      %p244 = scmp.ne.s32.totalorder %s230, %s231
      %p245 = scmp.eq.s32.totalorder %s29, 1
      %p246 = por %p244, %p245
      %p248 = scmp.ne.s32.totalorder %s231, %s247
      %p249 = scmp.eq.s32.totalorder %s29, 0
      %p250 = por %p248, %p249
      %p251 = scmp.le.s32.totalorder 1, %s23
      %p252 = scmp.lt.s32.totalorder %s23, 3
      %p253 = pnand %p251, %p252
      %p254 = pneg %p253
      // Predicated region
      $region9: #{tpu_custom_call.1} parent=5 // pred_check
        _
      $region10: #{tpu_custom_call.1} parent=5 // pred_check_branch
        %256 = sbr.rel (%p253) target = $region12
      $region11: #{tpu_custom_call.1} parent=5 // pred_region
        %s257 = ssub.s32 %s23, 1
        // Predicated region
        $region13: #{tpu_custom_call.1} parent=11 // pred_check
          %p258 = pneg %p70
        $region14: #{tpu_custom_call.1} parent=11 // pred_check_branch
          %260 = sbr.rel (%p258) target = $region16
        $region15: #{tpu_custom_call.1} parent=11 // pred_region
          %262 = vsyncadd [#allocation6], 0
          %s263 = sshll.u32 %s1, 4
          %s264 = int_to_ptr.hbm [resolvable:$true] %s263
          %s265 = sshll.u32 [#allocation5], 4
          %s266 = int_to_ptr.vmem [resolvable:$true] %s265
          %271 = dma.hbm_to_vmem [thread:$0]  %s264, 1024, %s266, [#allocation6], 64, 64, 4
        $region16: #{tpu_custom_call.1} parent=11 // pred_fallthru
          _
        // Predicated region
        $region17: #{tpu_custom_call.1} parent=11 // pred_check
          %p272 = pneg %p91
        $region18: #{tpu_custom_call.1} parent=11 // pred_check_branch
          %274 = sbr.rel (%p272) target = $region20
        $region19: #{tpu_custom_call.1} parent=11 // pred_region
          _
        $region20: #{tpu_custom_call.1} parent=11 // pred_fallthru
          _
        // Predicated region
        $region21: #{tpu_custom_call.1} parent=11 // pred_check
          %p275 = pneg %p112
        $region22: #{tpu_custom_call.1} parent=11 // pred_check_branch
          %277 = sbr.rel (%p275) target = $region24
        $region23: #{tpu_custom_call.1} parent=11 // pred_region
          %279 = vsyncadd [#allocation6], 0
          %s280 = sshll.u32 %s3, 4
          %s281 = int_to_ptr.hbm [resolvable:$true] %s280
          %s282 = sshll.u32 [#allocation7], 4
          %s283 = int_to_ptr.vmem [resolvable:$true] %s282
          %288 = dma.hbm_to_vmem [thread:$0]  %s281, 1024, %s283, [#allocation6], 64, 64, 4
        $region24: #{tpu_custom_call.1} parent=11 // pred_fallthru
          _
        // Predicated region
        $region25: #{tpu_custom_call.1} parent=11 // pred_check
          %p289 = pneg %p133
        $region26: #{tpu_custom_call.1} parent=11 // pred_check_branch
          %291 = sbr.rel (%p289) target = $region28
        $region27: #{tpu_custom_call.1} parent=11 // pred_region
          _
        $region28: #{tpu_custom_call.1} parent=11 // pred_fallthru
          _
        // Predicated region
        $region29: #{tpu_custom_call.1} parent=11 // pred_check
          %p292 = pneg %p154
        $region30: #{tpu_custom_call.1} parent=11 // pred_check_branch
          %294 = sbr.rel (%p292) target = $region32
        $region31: #{tpu_custom_call.1} parent=11 // pred_region
          %296 = vsyncadd [#allocation9], 0
          %s297 = sshll.u32 %s5, 4
          %s298 = int_to_ptr.hbm [resolvable:$true] %s297
          %s299 = sshll.u32 [#allocation8], 4
          %s300 = int_to_ptr.vmem [resolvable:$true] %s299
          %305 = dma.hbm_to_vmem [thread:$0]  %s298, 1024, %s300, [#allocation9], 64, 64, 4
        $region32: #{tpu_custom_call.1} parent=11 // pred_fallthru
          _
        // Predicated region
        $region33: #{tpu_custom_call.1} parent=11 // pred_check
          %p306 = pneg %p175
        $region34: #{tpu_custom_call.1} parent=11 // pred_check_branch
          %308 = sbr.rel (%p306) target = $region36
        $region35: #{tpu_custom_call.1} parent=11 // pred_region
          _
        $region36: #{tpu_custom_call.1} parent=11 // pred_fallthru
          _
        // Predicated region
        $region37: #{tpu_custom_call.1} parent=11 // pred_check
          %p309 = pneg %p196
        $region38: #{tpu_custom_call.1} parent=11 // pred_check_branch
          %311 = sbr.rel (%p309) target = $region40
        $region39: #{tpu_custom_call.1} parent=11 // pred_region
          %313 = vsyncadd [#allocation9], 0
          %s314 = sshll.u32 %s7, 4
          %s315 = int_to_ptr.hbm [resolvable:$true] %s314
          %s316 = sshll.u32 [#allocation10], 4
          %s317 = int_to_ptr.vmem [resolvable:$true] %s316
          %322 = dma.hbm_to_vmem [thread:$0]  %s315, 1024, %s317, [#allocation9], 64, 64, 4
        $region40: #{tpu_custom_call.1} parent=11 // pred_fallthru
          _
        // Predicated region
        $region41: #{tpu_custom_call.1} parent=11 // pred_check
          %p323 = pneg %p217
        $region42: #{tpu_custom_call.1} parent=11 // pred_check_branch
          %325 = sbr.rel (%p323) target = $region44
        $region43: #{tpu_custom_call.1} parent=11 // pred_region
          _
        $region44: #{tpu_custom_call.1} parent=11 // pred_fallthru
          _
      $region12: #{tpu_custom_call.1} parent=5 // pred_fallthru
        _
      %p326 = scmp.lt.s32.totalorder %s23, 2
      // Predicated region
      $region45: #{tpu_custom_call.1} parent=5 // pred_check
        %p327 = pneg %p326
      $region46: #{tpu_custom_call.1} parent=5 // pred_check_branch
        %329 = sbr.rel (%p327) target = $region48
      $region47: #{tpu_custom_call.1} parent=5 // pred_region
        // Predicated region
        $region49: #{tpu_custom_call.1} parent=47 // pred_check
          %p330 = pneg %p43
        $region50: #{tpu_custom_call.1} parent=47 // pred_check_branch
          %332 = sbr.rel (%p330) target = $region52
        $region51: #{tpu_custom_call.1} parent=47 // pred_region
          %s333 = sand.u32 %s33, 1
          %s334 = scalar_lea.sflag [#allocation3], %s333
          %s335 = sand.u32 %s33, 1
          %s336 = smul.addr %s335, 128
          %s337 = scalar_lea.vmem [#allocation2], %s336
          %s338 = smul.u32 16, %s23
          %340 = vsyncadd %s334, 0
          %s341 = smul.addr %s338, 8
          %s342 = scalar_lea.hbm %s0, %s341
          %s343 = sshll.u32 %s342, 4
          %s344 = int_to_ptr.hbm [resolvable:$true] %s343
          %s345 = sshll.u32 %s337, 4
          %s346 = int_to_ptr.vmem [resolvable:$true] %s345
          %351 = dma.hbm_to_vmem [thread:$0]  %s344, 2048, %s346, %s334, 128, 128, 8
        $region52: #{tpu_custom_call.1} parent=47 // pred_fallthru
          _
      $region48: #{tpu_custom_call.1} parent=5 // pred_fallthru
        _
      %p352 = scmp.le.s32.totalorder 1, %s23
      %p353 = scmp.lt.s32.totalorder %s23, 3
      %p354 = pnand %p352, %p353
      %p355 = pneg %p354
      // Predicated region
      $region53: #{tpu_custom_call.1} parent=5 // pred_check
        _
      $region54: #{tpu_custom_call.1} parent=5 // pred_check_branch
        %357 = sbr.rel (%p354) target = $region56
      $region55: #{tpu_custom_call.1} parent=5 // pred_region
        %s358 = ssub.s32 %s23, 1
        %s359 = sand.u32 %s36, 1
        %s360 = scalar_lea.sflag [#allocation3], %s359
        %s361 = sand.u32 %s36, 1
        %s362 = smul.addr %s361, 128
        %s363 = scalar_lea.vmem [#allocation2], %s362
        // Predicated region
        $region57: #{tpu_custom_call.1} parent=55 // pred_check
          %p364 = pneg %p49
        $region58: #{tpu_custom_call.1} parent=55 // pred_check_branch
          %366 = sbr.rel (%p364) target = $region60
        $region59: #{tpu_custom_call.1} parent=55 // pred_region
          %368 = dma.done %s360, 2048
        $region60: #{tpu_custom_call.1} parent=55 // pred_fallthru
          _
        // Predicated region
        $region61: #{tpu_custom_call.1} parent=55 // pred_check
          %p369 = pneg %p70
        $region62: #{tpu_custom_call.1} parent=55 // pred_check_branch
          %371 = sbr.rel (%p369) target = $region64
        $region63: #{tpu_custom_call.1} parent=55 // pred_region
          %373 = dma.done [#allocation6], 1024
        $region64: #{tpu_custom_call.1} parent=55 // pred_fallthru
          _
        // Predicated region
        $region65: #{tpu_custom_call.1} parent=55 // pred_check
          %p374 = pneg %p112
        $region66: #{tpu_custom_call.1} parent=55 // pred_check_branch
          %376 = sbr.rel (%p374) target = $region68
        $region67: #{tpu_custom_call.1} parent=55 // pred_region
          %378 = dma.done [#allocation6], 1024
        $region68: #{tpu_custom_call.1} parent=55 // pred_fallthru
          _
        // Predicated region
        $region69: #{tpu_custom_call.1} parent=55 // pred_check
          %p379 = pneg %p154
        $region70: #{tpu_custom_call.1} parent=55 // pred_check_branch
          %381 = sbr.rel (%p379) target = $region72
        $region71: #{tpu_custom_call.1} parent=55 // pred_region
          %383 = dma.done [#allocation9], 1024
        $region72: #{tpu_custom_call.1} parent=55 // pred_fallthru
          _
        // Predicated region
        $region73: #{tpu_custom_call.1} parent=55 // pred_check
          %p384 = pneg %p196
        $region74: #{tpu_custom_call.1} parent=55 // pred_check_branch
          %386 = sbr.rel (%p384) target = $region76
        $region75: #{tpu_custom_call.1} parent=55 // pred_region
          %388 = dma.done [#allocation9], 1024
        $region76: #{tpu_custom_call.1} parent=55 // pred_fallthru
          _
        %s389 = sand.u32 %s36, 1
        %s390 = scalar_lea.sflag [#allocation3], %s389
        %s391 = sand.u32 %s36, 1
        %s392 = smul.addr %s391, 128
        %s393 = scalar_lea.vmem [#allocation2], %s392
        %p394 = pneg %p49
        %p395 = pneg %p46
        %p396 = pneg %p70
        %p397 = pneg %p67
        %p398 = pneg %p91
        %p399 = pneg %p88
        %p400 = pneg %p112
        %p401 = pneg %p109
        %p402 = pneg %p133
        %p403 = pneg %p130
        %p404 = pneg %p154
        %p405 = pneg %p151
        %p406 = pneg %p175
        %p407 = pneg %p172
        %p408 = pneg %p196
        %p409 = pneg %p193
        %p410 = pneg %p217
        %p411 = pneg %p214
        %p412 = pneg %p243
        %p413 = pneg %p240
        %s414 = sand.u32 %s230, 1
        %s415 = scalar_lea.sflag [#allocation4], %s414
        %s416 = sand.u32 %s230, 1
        %s417 = smul.addr %s416, 128
        %s418 = scalar_lea.vmem [#allocation11], %s417
        %s419 = smul.u32 16, %s28
        %s420 = smul.u32 16, %s28
        %v421 = vld [vmem:[%s363] sm:$0xff]
        %v422 = vld [vmem:[%s363 + $0x8] sm:$0xff]
        %v423 = vld [vmem:[%s363 + $0x10] sm:$0xff]
        %v424 = vld [vmem:[%s363 + $0x18] sm:$0xff]
        %v425 = vld [vmem:[%s363 + $0x20] sm:$0xff]
        %v426 = vld [vmem:[%s363 + $0x28] sm:$0xff]
        %v427 = vld [vmem:[%s363 + $0x30] sm:$0xff]
        %v428 = vld [vmem:[%s363 + $0x38] sm:$0xff]
        %v429 = vld [vmem:[%s363 + $0x40] sm:$0xff]
        %v430 = vld [vmem:[%s363 + $0x48] sm:$0xff]
        %v431 = vld [vmem:[%s363 + $0x50] sm:$0xff]
        %v432 = vld [vmem:[%s363 + $0x58] sm:$0xff]
        %v433 = vld [vmem:[%s363 + $0x60] sm:$0xff]
        %v434 = vld [vmem:[%s363 + $0x68] sm:$0xff]
        %v435 = vld [vmem:[%s363 + $0x70] sm:$0xff]
        %v436 = vld [vmem:[%s363 + $0x78] sm:$0xff]
        %v437 = vld [vmem:[#allocation5] sm:$0xf]
        %v438 = vld [vmem:[#allocation5 + $0x4] sm:$0xf]
        %v439 = vld [vmem:[#allocation5 + $0x8] sm:$0xf]
        %v440 = vld [vmem:[#allocation5 + $0xc] sm:$0xf]
        %v441 = vld [vmem:[#allocation5 + $0x10] sm:$0xf]
        %v442 = vld [vmem:[#allocation5 + $0x14] sm:$0xf]
        %v443 = vld [vmem:[#allocation5 + $0x18] sm:$0xf]
        %v444 = vld [vmem:[#allocation5 + $0x1c] sm:$0xf]
        %v445 = vld [vmem:[#allocation5 + $0x20] sm:$0xf]
        %v446 = vld [vmem:[#allocation5 + $0x24] sm:$0xf]
        %v447 = vld [vmem:[#allocation5 + $0x28] sm:$0xf]
        %v448 = vld [vmem:[#allocation5 + $0x2c] sm:$0xf]
        %v449 = vld [vmem:[#allocation5 + $0x30] sm:$0xf]
        %v450 = vld [vmem:[#allocation5 + $0x34] sm:$0xf]
        %v451 = vld [vmem:[#allocation5 + $0x38] sm:$0xf]
        %v452 = vld [vmem:[#allocation5 + $0x3c] sm:$0xf]
        %v453 = vld [vmem:[%s2] sm:$0x1]
        %v454 = vpack.c.bf16 %v422, %v421
        %v455 = vpack.c.bf16 %v424, %v423
        %v456 = vpack.c.bf16 %v426, %v425
        %v457 = vpack.c.bf16 %v428, %v427
        %v458 = vpack.c.bf16 %v430, %v429
        %v459 = vpack.c.bf16 %v432, %v431
        %v460 = vpack.c.bf16 %v434, %v433
        %v461 = vpack.c.bf16 %v436, %v435
        %v463 = vperm.slane %v453, 0
        %v481 = vunpack.c.l.b16 %v437
        %v482 = vunpack.c.l.b16 %v438
        %v483 = vunpack.c.l.b16 %v439
        %v484 = vunpack.c.l.b16 %v440
        %v485 = vunpack.c.l.b16 %v441
        %v486 = vunpack.c.l.b16 %v442
        %v487 = vunpack.c.l.b16 %v443
        %v488 = vunpack.c.l.b16 %v444
        %v489 = vunpack.c.l.b16 %v445
        %v490 = vunpack.c.l.b16 %v446
        %v491 = vunpack.c.l.b16 %v447
        %v492 = vunpack.c.l.b16 %v448
        %v493 = vunpack.c.l.b16 %v449
        %v494 = vunpack.c.l.b16 %v450
        %v495 = vunpack.c.l.b16 %v451
        %v496 = vunpack.c.l.b16 %v452
        %v497 = vpack.c.b16 %v482, %v481
        %v498 = vpack.c.b16 %v484, %v483
        %v499 = vpack.c.b16 %v486, %v485
        %v500 = vpack.c.b16 %v488, %v487
        %v501 = vpack.c.b16 %v490, %v489
        %v502 = vpack.c.b16 %v492, %v491
        %v503 = vpack.c.b16 %v494, %v493
        %v504 = vpack.c.b16 %v496, %v495
        %513 = vmatpush.bf16.msra.mxu0 %v504
        %514 = vmatpush.bf16.msra.mxu0 %v503
        %515 = vmatpush.bf16.msra.mxu0 %v502
        %516 = vmatpush.bf16.msra.mxu0 %v501
        %517 = vmatpush.bf16.msra.mxu0 %v500
        %518 = vmatpush.bf16.msra.mxu0 %v499
        %519 = vmatpush.bf16.msra.mxu0 %v498
        %520 = vmatpush.bf16.msra.mxu0 %v497
        %521 = vmatmul.bf16.gmra.mxu0 %v454
        %v522 = vpop.f32.mrf.mxu0
        %v523 = vadd.f32 %v463, %v522
        %v524 = vpop.f32.mrf.mxu0
        %v525 = vadd.f32 %v463, %v524
        %526 = vmatmul.bf16.gmra.mxu0 %v455
        %v527 = vpop.f32.mrf.mxu0
        %v528 = vadd.f32 %v463, %v527
        %v529 = vpop.f32.mrf.mxu0
        %v530 = vadd.f32 %v463, %v529
        %531 = vmatmul.bf16.gmra.mxu0 %v456
        %v532 = vpop.f32.mrf.mxu0
        %v533 = vadd.f32 %v463, %v532
        %v534 = vpop.f32.mrf.mxu0
        %v535 = vadd.f32 %v463, %v534
        %536 = vmatmul.bf16.gmra.mxu0 %v457
        %v537 = vpop.f32.mrf.mxu0
        %v538 = vadd.f32 %v463, %v537
        %v539 = vpop.f32.mrf.mxu0
        %v540 = vadd.f32 %v463, %v539
        %541 = vmatmul.bf16.gmra.mxu0 %v458
        %v542 = vpop.f32.mrf.mxu0
        %v543 = vadd.f32 %v463, %v542
        %v544 = vpop.f32.mrf.mxu0
        %v545 = vadd.f32 %v463, %v544
        %546 = vmatmul.bf16.gmra.mxu0 %v459
        %v547 = vpop.f32.mrf.mxu0
        %v548 = vadd.f32 %v463, %v547
        %v549 = vpop.f32.mrf.mxu0
        %v550 = vadd.f32 %v463, %v549
        %551 = vmatmul.bf16.gmra.mxu0 %v460
        %v552 = vpop.f32.mrf.mxu0
        %v553 = vadd.f32 %v463, %v552
        %v554 = vpop.f32.mrf.mxu0
        %v555 = vadd.f32 %v463, %v554
        %556 = vmatmul.bf16.gmra.mxu0 %v461
        %v557 = vpop.f32.mrf.mxu0
        %v558 = vadd.f32 %v463, %v557
        %v559 = vpop.f32.mrf.mxu0
        %v560 = vadd.f32 %v463, %v559
        %561 = vdwg.mxu0
        %v562 = vmax.f32 %v523, 0.0
        %v563 = vmax.f32 %v525, 0.0
        %v564 = vmax.f32 %v528, 0.0
        %v565 = vmax.f32 %v530, 0.0
        %v566 = vmax.f32 %v533, 0.0
        %v567 = vmax.f32 %v535, 0.0
        %v568 = vmax.f32 %v538, 0.0
        %v569 = vmax.f32 %v540, 0.0
        %v570 = vmax.f32 %v543, 0.0
        %v571 = vmax.f32 %v545, 0.0
        %v572 = vmax.f32 %v548, 0.0
        %v573 = vmax.f32 %v550, 0.0
        %v574 = vmax.f32 %v553, 0.0
        %v575 = vmax.f32 %v555, 0.0
        %v576 = vmax.f32 %v558, 0.0
        %v577 = vmax.f32 %v560, 0.0
        %v578 = vld [vmem:[#allocation7] sm:$0xf]
        %v579 = vld [vmem:[#allocation7 + $0x4] sm:$0xf]
        %v580 = vld [vmem:[#allocation7 + $0x8] sm:$0xf]
        %v581 = vld [vmem:[#allocation7 + $0xc] sm:$0xf]
        %v582 = vld [vmem:[#allocation7 + $0x10] sm:$0xf]
        %v583 = vld [vmem:[#allocation7 + $0x14] sm:$0xf]
        %v584 = vld [vmem:[#allocation7 + $0x18] sm:$0xf]
        %v585 = vld [vmem:[#allocation7 + $0x1c] sm:$0xf]
        %v586 = vld [vmem:[#allocation7 + $0x20] sm:$0xf]
        %v587 = vld [vmem:[#allocation7 + $0x24] sm:$0xf]
        %v588 = vld [vmem:[#allocation7 + $0x28] sm:$0xf]
        %v589 = vld [vmem:[#allocation7 + $0x2c] sm:$0xf]
        %v590 = vld [vmem:[#allocation7 + $0x30] sm:$0xf]
        %v591 = vld [vmem:[#allocation7 + $0x34] sm:$0xf]
        %v592 = vld [vmem:[#allocation7 + $0x38] sm:$0xf]
        %v593 = vld [vmem:[#allocation7 + $0x3c] sm:$0xf]
        %v594 = vld [vmem:[%s4] sm:$0x1]
        %v595 = vpack.c.bf16 %v563, %v562
        %v596 = vpack.c.bf16 %v565, %v564
        %v597 = vpack.c.bf16 %v567, %v566
        %v598 = vpack.c.bf16 %v569, %v568
        %v599 = vpack.c.bf16 %v571, %v570
        %v600 = vpack.c.bf16 %v573, %v572
        %v601 = vpack.c.bf16 %v575, %v574
        %v602 = vpack.c.bf16 %v577, %v576
        %v604 = vperm.slane %v594, 0
        %v622 = vunpack.c.l.b16 %v578
        %v623 = vunpack.c.l.b16 %v579
        %v624 = vunpack.c.l.b16 %v580
        %v625 = vunpack.c.l.b16 %v581
        %v626 = vunpack.c.l.b16 %v582
        %v627 = vunpack.c.l.b16 %v583
        %v628 = vunpack.c.l.b16 %v584
        %v629 = vunpack.c.l.b16 %v585
        %v630 = vunpack.c.l.b16 %v586
        %v631 = vunpack.c.l.b16 %v587
        %v632 = vunpack.c.l.b16 %v588
        %v633 = vunpack.c.l.b16 %v589
        %v634 = vunpack.c.l.b16 %v590
        %v635 = vunpack.c.l.b16 %v591
        %v636 = vunpack.c.l.b16 %v592
        %v637 = vunpack.c.l.b16 %v593
        %v638 = vpack.c.b16 %v623, %v622
        %v639 = vpack.c.b16 %v625, %v624
        %v640 = vpack.c.b16 %v627, %v626
        %v641 = vpack.c.b16 %v629, %v628
        %v642 = vpack.c.b16 %v631, %v630
        %v643 = vpack.c.b16 %v633, %v632
        %v644 = vpack.c.b16 %v635, %v634
        %v645 = vpack.c.b16 %v637, %v636
        %654 = vmatpush.bf16.msra.mxu0 %v645
        %655 = vmatpush.bf16.msra.mxu0 %v644
        %656 = vmatpush.bf16.msra.mxu0 %v643
        %657 = vmatpush.bf16.msra.mxu0 %v642
        %658 = vmatpush.bf16.msra.mxu0 %v641
        %659 = vmatpush.bf16.msra.mxu0 %v640
        %660 = vmatpush.bf16.msra.mxu0 %v639
        %661 = vmatpush.bf16.msra.mxu0 %v638
        %662 = vmatmul.bf16.gmra.mxu0 %v595
        %v663 = vpop.f32.mrf.mxu0
        %v664 = vadd.f32 %v604, %v663
        %v665 = vpop.f32.mrf.mxu0
        %v666 = vadd.f32 %v604, %v665
        %667 = vmatmul.bf16.gmra.mxu0 %v596
        %v668 = vpop.f32.mrf.mxu0
        %v669 = vadd.f32 %v604, %v668
        %v670 = vpop.f32.mrf.mxu0
        %v671 = vadd.f32 %v604, %v670
        %672 = vmatmul.bf16.gmra.mxu0 %v597
        %v673 = vpop.f32.mrf.mxu0
        %v674 = vadd.f32 %v604, %v673
        %v675 = vpop.f32.mrf.mxu0
        %v676 = vadd.f32 %v604, %v675
        %677 = vmatmul.bf16.gmra.mxu0 %v598
        %v678 = vpop.f32.mrf.mxu0
        %v679 = vadd.f32 %v604, %v678
        %v680 = vpop.f32.mrf.mxu0
        %v681 = vadd.f32 %v604, %v680
        %682 = vmatmul.bf16.gmra.mxu0 %v599
        %v683 = vpop.f32.mrf.mxu0
        %v684 = vadd.f32 %v604, %v683
        %v685 = vpop.f32.mrf.mxu0
        %v686 = vadd.f32 %v604, %v685
        %687 = vmatmul.bf16.gmra.mxu0 %v600
        %v688 = vpop.f32.mrf.mxu0
        %v689 = vadd.f32 %v604, %v688
        %v690 = vpop.f32.mrf.mxu0
        %v691 = vadd.f32 %v604, %v690
        %692 = vmatmul.bf16.gmra.mxu0 %v601
        %v693 = vpop.f32.mrf.mxu0
        %v694 = vadd.f32 %v604, %v693
        %v695 = vpop.f32.mrf.mxu0
        %v696 = vadd.f32 %v604, %v695
        %697 = vmatmul.bf16.gmra.mxu0 %v602
        %v698 = vpop.f32.mrf.mxu0
        %v699 = vadd.f32 %v604, %v698
        %v700 = vpop.f32.mrf.mxu0
        %v701 = vadd.f32 %v604, %v700
        %702 = vdwg.mxu0
        %v703 = vmax.f32 %v664, 0.0
        %v704 = vmax.f32 %v666, 0.0
        %v705 = vmax.f32 %v669, 0.0
        %v706 = vmax.f32 %v671, 0.0
        %v707 = vmax.f32 %v674, 0.0
        %v708 = vmax.f32 %v676, 0.0
        %v709 = vmax.f32 %v679, 0.0
        %v710 = vmax.f32 %v681, 0.0
        %v711 = vmax.f32 %v684, 0.0
        %v712 = vmax.f32 %v686, 0.0
        %v713 = vmax.f32 %v689, 0.0
        %v714 = vmax.f32 %v691, 0.0
        %v715 = vmax.f32 %v694, 0.0
        %v716 = vmax.f32 %v696, 0.0
        %v717 = vmax.f32 %v699, 0.0
        %v718 = vmax.f32 %v701, 0.0
        %v719 = vld [vmem:[#allocation8] sm:$0xf]
        %v720 = vld [vmem:[#allocation8 + $0x4] sm:$0xf]
        %v721 = vld [vmem:[#allocation8 + $0x8] sm:$0xf]
        %v722 = vld [vmem:[#allocation8 + $0xc] sm:$0xf]
        %v723 = vld [vmem:[#allocation8 + $0x10] sm:$0xf]
        %v724 = vld [vmem:[#allocation8 + $0x14] sm:$0xf]
        %v725 = vld [vmem:[#allocation8 + $0x18] sm:$0xf]
        %v726 = vld [vmem:[#allocation8 + $0x1c] sm:$0xf]
        %v727 = vld [vmem:[#allocation8 + $0x20] sm:$0xf]
        %v728 = vld [vmem:[#allocation8 + $0x24] sm:$0xf]
        %v729 = vld [vmem:[#allocation8 + $0x28] sm:$0xf]
        %v730 = vld [vmem:[#allocation8 + $0x2c] sm:$0xf]
        %v731 = vld [vmem:[#allocation8 + $0x30] sm:$0xf]
        %v732 = vld [vmem:[#allocation8 + $0x34] sm:$0xf]
        %v733 = vld [vmem:[#allocation8 + $0x38] sm:$0xf]
        %v734 = vld [vmem:[#allocation8 + $0x3c] sm:$0xf]
        %v735 = vld [vmem:[%s6] sm:$0x1]
        %v736 = vpack.c.bf16 %v704, %v703
        %v737 = vpack.c.bf16 %v706, %v705
        %v738 = vpack.c.bf16 %v708, %v707
        %v739 = vpack.c.bf16 %v710, %v709
        %v740 = vpack.c.bf16 %v712, %v711
        %v741 = vpack.c.bf16 %v714, %v713
        %v742 = vpack.c.bf16 %v716, %v715
        %v743 = vpack.c.bf16 %v718, %v717
        %v745 = vperm.slane %v735, 0
        %v763 = vunpack.c.l.b16 %v719
        %v764 = vunpack.c.l.b16 %v720
        %v765 = vunpack.c.l.b16 %v721
        %v766 = vunpack.c.l.b16 %v722
        %v767 = vunpack.c.l.b16 %v723
        %v768 = vunpack.c.l.b16 %v724
        %v769 = vunpack.c.l.b16 %v725
        %v770 = vunpack.c.l.b16 %v726
        %v771 = vunpack.c.l.b16 %v727
        %v772 = vunpack.c.l.b16 %v728
        %v773 = vunpack.c.l.b16 %v729
        %v774 = vunpack.c.l.b16 %v730
        %v775 = vunpack.c.l.b16 %v731
        %v776 = vunpack.c.l.b16 %v732
        %v777 = vunpack.c.l.b16 %v733
        %v778 = vunpack.c.l.b16 %v734
        %v779 = vpack.c.b16 %v764, %v763
        %v780 = vpack.c.b16 %v766, %v765
        %v781 = vpack.c.b16 %v768, %v767
        %v782 = vpack.c.b16 %v770, %v769
        %v783 = vpack.c.b16 %v772, %v771
        %v784 = vpack.c.b16 %v774, %v773
        %v785 = vpack.c.b16 %v776, %v775
        %v786 = vpack.c.b16 %v778, %v777
        %795 = vmatpush.bf16.msra.mxu0 %v786
        %796 = vmatpush.bf16.msra.mxu0 %v785
        %797 = vmatpush.bf16.msra.mxu0 %v784
        %798 = vmatpush.bf16.msra.mxu0 %v783
        %799 = vmatpush.bf16.msra.mxu0 %v782
        %800 = vmatpush.bf16.msra.mxu0 %v781
        %801 = vmatpush.bf16.msra.mxu0 %v780
        %802 = vmatpush.bf16.msra.mxu0 %v779
        %803 = vmatmul.bf16.gmra.mxu0 %v736
        %v804 = vpop.f32.mrf.mxu0
        %v805 = vadd.f32 %v745, %v804
        %v806 = vpop.f32.mrf.mxu0
        %v807 = vadd.f32 %v745, %v806
        %808 = vmatmul.bf16.gmra.mxu0 %v737
        %v809 = vpop.f32.mrf.mxu0
        %v810 = vadd.f32 %v745, %v809
        %v811 = vpop.f32.mrf.mxu0
        %v812 = vadd.f32 %v745, %v811
        %813 = vmatmul.bf16.gmra.mxu0 %v738
        %v814 = vpop.f32.mrf.mxu0
        %v815 = vadd.f32 %v745, %v814
        %v816 = vpop.f32.mrf.mxu0
        %v817 = vadd.f32 %v745, %v816
        %818 = vmatmul.bf16.gmra.mxu0 %v739
        %v819 = vpop.f32.mrf.mxu0
        %v820 = vadd.f32 %v745, %v819
        %v821 = vpop.f32.mrf.mxu0
        %v822 = vadd.f32 %v745, %v821
        %823 = vmatmul.bf16.gmra.mxu0 %v740
        %v824 = vpop.f32.mrf.mxu0
        %v825 = vadd.f32 %v745, %v824
        %v826 = vpop.f32.mrf.mxu0
        %v827 = vadd.f32 %v745, %v826
        %828 = vmatmul.bf16.gmra.mxu0 %v741
        %v829 = vpop.f32.mrf.mxu0
        %v830 = vadd.f32 %v745, %v829
        %v831 = vpop.f32.mrf.mxu0
        %v832 = vadd.f32 %v745, %v831
        %833 = vmatmul.bf16.gmra.mxu0 %v742
        %v834 = vpop.f32.mrf.mxu0
        %v835 = vadd.f32 %v745, %v834
        %v836 = vpop.f32.mrf.mxu0
        %v837 = vadd.f32 %v745, %v836
        %838 = vmatmul.bf16.gmra.mxu0 %v743
        %v839 = vpop.f32.mrf.mxu0
        %v840 = vadd.f32 %v745, %v839
        %v841 = vpop.f32.mrf.mxu0
        %v842 = vadd.f32 %v745, %v841
        %843 = vdwg.mxu0
        %v844 = vmax.f32 %v805, 0.0
        %v845 = vmax.f32 %v807, 0.0
        %v846 = vmax.f32 %v810, 0.0
        %v847 = vmax.f32 %v812, 0.0
        %v848 = vmax.f32 %v815, 0.0
        %v849 = vmax.f32 %v817, 0.0
        %v850 = vmax.f32 %v820, 0.0
        %v851 = vmax.f32 %v822, 0.0
        %v852 = vmax.f32 %v825, 0.0
        %v853 = vmax.f32 %v827, 0.0
        %v854 = vmax.f32 %v830, 0.0
        %v855 = vmax.f32 %v832, 0.0
        %v856 = vmax.f32 %v835, 0.0
        %v857 = vmax.f32 %v837, 0.0
        %v858 = vmax.f32 %v840, 0.0
        %v859 = vmax.f32 %v842, 0.0
        %v860 = vld [vmem:[#allocation10] sm:$0xf]
        %v861 = vld [vmem:[#allocation10 + $0x4] sm:$0xf]
        %v862 = vld [vmem:[#allocation10 + $0x8] sm:$0xf]
        %v863 = vld [vmem:[#allocation10 + $0xc] sm:$0xf]
        %v864 = vld [vmem:[#allocation10 + $0x10] sm:$0xf]
        %v865 = vld [vmem:[#allocation10 + $0x14] sm:$0xf]
        %v866 = vld [vmem:[#allocation10 + $0x18] sm:$0xf]
        %v867 = vld [vmem:[#allocation10 + $0x1c] sm:$0xf]
        %v868 = vld [vmem:[#allocation10 + $0x20] sm:$0xf]
        %v869 = vld [vmem:[#allocation10 + $0x24] sm:$0xf]
        %v870 = vld [vmem:[#allocation10 + $0x28] sm:$0xf]
        %v871 = vld [vmem:[#allocation10 + $0x2c] sm:$0xf]
        %v872 = vld [vmem:[#allocation10 + $0x30] sm:$0xf]
        %v873 = vld [vmem:[#allocation10 + $0x34] sm:$0xf]
        %v874 = vld [vmem:[#allocation10 + $0x38] sm:$0xf]
        %v875 = vld [vmem:[#allocation10 + $0x3c] sm:$0xf]
        %v876 = vld [vmem:[%s8] sm:$0x1]
        %v877 = vpack.c.bf16 %v845, %v844
        %v878 = vpack.c.bf16 %v847, %v846
        %v879 = vpack.c.bf16 %v849, %v848
        %v880 = vpack.c.bf16 %v851, %v850
        %v881 = vpack.c.bf16 %v853, %v852
        %v882 = vpack.c.bf16 %v855, %v854
        %v883 = vpack.c.bf16 %v857, %v856
        %v884 = vpack.c.bf16 %v859, %v858
        %v886 = vperm.slane %v876, 0
        %v904 = vunpack.c.l.b16 %v860
        %v905 = vunpack.c.l.b16 %v861
        %v906 = vunpack.c.l.b16 %v862
        %v907 = vunpack.c.l.b16 %v863
        %v908 = vunpack.c.l.b16 %v864
        %v909 = vunpack.c.l.b16 %v865
        %v910 = vunpack.c.l.b16 %v866
        %v911 = vunpack.c.l.b16 %v867
        %v912 = vunpack.c.l.b16 %v868
        %v913 = vunpack.c.l.b16 %v869
        %v914 = vunpack.c.l.b16 %v870
        %v915 = vunpack.c.l.b16 %v871
        %v916 = vunpack.c.l.b16 %v872
        %v917 = vunpack.c.l.b16 %v873
        %v918 = vunpack.c.l.b16 %v874
        %v919 = vunpack.c.l.b16 %v875
        %v920 = vpack.c.b16 %v905, %v904
        %v921 = vpack.c.b16 %v907, %v906
        %v922 = vpack.c.b16 %v909, %v908
        %v923 = vpack.c.b16 %v911, %v910
        %v924 = vpack.c.b16 %v913, %v912
        %v925 = vpack.c.b16 %v915, %v914
        %v926 = vpack.c.b16 %v917, %v916
        %v927 = vpack.c.b16 %v919, %v918
        %936 = vmatpush.bf16.msra.mxu0 %v927
        %937 = vmatpush.bf16.msra.mxu0 %v926
        %938 = vmatpush.bf16.msra.mxu0 %v925
        %939 = vmatpush.bf16.msra.mxu0 %v924
        %940 = vmatpush.bf16.msra.mxu0 %v923
        %941 = vmatpush.bf16.msra.mxu0 %v922
        %942 = vmatpush.bf16.msra.mxu0 %v921
        %943 = vmatpush.bf16.msra.mxu0 %v920
        %944 = vmatmul.bf16.gmra.mxu0 %v877
        %v945 = vpop.f32.mrf.mxu0
        %v946 = vadd.f32 %v886, %v945
        %v947 = vpop.f32.mrf.mxu0
        %v948 = vadd.f32 %v886, %v947
        %949 = vmatmul.bf16.gmra.mxu0 %v878
        %v950 = vpop.f32.mrf.mxu0
        %v951 = vadd.f32 %v886, %v950
        %v952 = vpop.f32.mrf.mxu0
        %v953 = vadd.f32 %v886, %v952
        %954 = vmatmul.bf16.gmra.mxu0 %v879
        %v955 = vpop.f32.mrf.mxu0
        %v956 = vadd.f32 %v886, %v955
        %v957 = vpop.f32.mrf.mxu0
        %v958 = vadd.f32 %v886, %v957
        %959 = vmatmul.bf16.gmra.mxu0 %v880
        %v960 = vpop.f32.mrf.mxu0
        %v961 = vadd.f32 %v886, %v960
        %v962 = vpop.f32.mrf.mxu0
        %v963 = vadd.f32 %v886, %v962
        %964 = vmatmul.bf16.gmra.mxu0 %v881
        %v965 = vpop.f32.mrf.mxu0
        %v966 = vadd.f32 %v886, %v965
        %v967 = vpop.f32.mrf.mxu0
        %v968 = vadd.f32 %v886, %v967
        %969 = vmatmul.bf16.gmra.mxu0 %v882
        %v970 = vpop.f32.mrf.mxu0
        %v971 = vadd.f32 %v886, %v970
        %v972 = vpop.f32.mrf.mxu0
        %v973 = vadd.f32 %v886, %v972
        %974 = vmatmul.bf16.gmra.mxu0 %v883
        %v975 = vpop.f32.mrf.mxu0
        %v976 = vadd.f32 %v886, %v975
        %v977 = vpop.f32.mrf.mxu0
        %v978 = vadd.f32 %v886, %v977
        %979 = vmatmul.bf16.gmra.mxu0 %v884
        %v980 = vpop.f32.mrf.mxu0
        %v981 = vadd.f32 %v886, %v980
        %v982 = vpop.f32.mrf.mxu0
        %v983 = vadd.f32 %v886, %v982
        %984 = vdwg.mxu0
        %985 = vst [vmem:[%s418] sm:$0xff] %v946
        %986 = vst [vmem:[%s418 + $0x8] sm:$0xff] %v948
        %987 = vst [vmem:[%s418 + $0x10] sm:$0xff] %v951
        %988 = vst [vmem:[%s418 + $0x18] sm:$0xff] %v953
        %989 = vst [vmem:[%s418 + $0x20] sm:$0xff] %v956
        %990 = vst [vmem:[%s418 + $0x28] sm:$0xff] %v958
        %991 = vst [vmem:[%s418 + $0x30] sm:$0xff] %v961
        %992 = vst [vmem:[%s418 + $0x38] sm:$0xff] %v963
        %993 = vst [vmem:[%s418 + $0x40] sm:$0xff] %v966
        %994 = vst [vmem:[%s418 + $0x48] sm:$0xff] %v968
        %995 = vst [vmem:[%s418 + $0x50] sm:$0xff] %v971
        %996 = vst [vmem:[%s418 + $0x58] sm:$0xff] %v973
        %997 = vst [vmem:[%s418 + $0x60] sm:$0xff] %v976
        %998 = vst [vmem:[%s418 + $0x68] sm:$0xff] %v978
        %999 = vst [vmem:[%s418 + $0x70] sm:$0xff] %v981
        %1000 = vst [vmem:[%s418 + $0x78] sm:$0xff] %v983
        %s1001 = sand.u32 %s230, 1
        %s1002 = scalar_lea.sflag [#allocation4], %s1001
        %s1003 = sand.u32 %s230, 1
        %s1004 = smul.addr %s1003, 128
        %s1005 = scalar_lea.vmem [#allocation11], %s1004
        // Predicated region
        $region77: #{tpu_custom_call.1} parent=55 // pred_check
          %p1006 = pneg %p240
        $region78: #{tpu_custom_call.1} parent=55 // pred_check_branch
          %1008 = sbr.rel (%p1006) target = $region80
        $region79: #{tpu_custom_call.1} parent=55 // pred_region
          %s1009 = smul.u32 16, %s28
          %1011 = vsyncadd %s1002, 0
          %s1012 = smul.addr %s1009, 8
          %s1013 = scalar_lea.hbm %s9, %s1012
          %s1014 = sshll.u32 %s1005, 4
          %s1015 = int_to_ptr.vmem [resolvable:$true] %s1014
          %s1016 = sshll.u32 %s1013, 4
          %s1017 = int_to_ptr.hbm [resolvable:$true] %s1016
          %1022 = dma.vmem_to_hbm [thread:$0]  %s1015, 2048, %s1017, %s1002, 128, 128, 8
        $region80: #{tpu_custom_call.1} parent=55 // pred_fallthru
          _
      $region56: #{tpu_custom_call.1} parent=5 // pred_fallthru
        _
      %p1023 = scmp.le.s32.totalorder 2, %s23
      // Predicated region
      $region81: #{tpu_custom_call.1} parent=5 // pred_check
        %p1024 = pneg %p1023
      $region82: #{tpu_custom_call.1} parent=5 // pred_check_branch
        %1026 = sbr.rel (%p1024) target = $region84
      $region83: #{tpu_custom_call.1} parent=5 // pred_region
        %s1027 = ssub.s32 %s23, 2
        // Predicated region
        $region85: #{tpu_custom_call.1} parent=83 // pred_check
          %p1028 = pneg %p246
        $region86: #{tpu_custom_call.1} parent=83 // pred_check_branch
          %1030 = sbr.rel (%p1028) target = $region88
        $region87: #{tpu_custom_call.1} parent=83 // pred_region
          %s1031 = sand.u32 %s231, 1
          %s1032 = scalar_lea.sflag [#allocation4], %s1031
          %s1033 = sand.u32 %s231, 1
          %s1034 = smul.addr %s1033, 128
          %s1035 = scalar_lea.vmem [#allocation11], %s1034
          %1037 = dma.done %s1032, 2048
        $region88: #{tpu_custom_call.1} parent=83 // pred_fallthru
          _
      $region84: #{tpu_custom_call.1} parent=5 // pred_fallthru
        _
    $region6: #{tpu_custom_call.1} parent=1 // loop_footer
      %s27 = sadd.s32 1, %s23
    $region7: #{tpu_custom_call.1} parent=1 // loop_footer_branch
      %22 = sbr.rel target = $region3
    $region8: #{tpu_custom_call.1} parent=1 // loop_exit
      _
    %1038 = vsyncpa [#allocation3], 1
    %s1039 = scalar_lea.sflag [#allocation3], 1
    %1040 = vsyncpa %s1039, 1
    %1041 = vsyncpa [#allocation6], 1
    %1042 = vsyncpa [#allocation9], 1
    %1043 = vsyncpa [#allocation4], 1
    %s1044 = scalar_lea.sflag [#allocation4], 1
    %1045 = vsyncpa %s1044, 1

// kernel: tpu_custom_call.1
$region0: #{tpu_custom_call.1}
  #allocation0 [shape = 'u32[]', space=smem, size = 0x4, offset = 0x4, fixed_abs, tag = 'smem constant byte address 0x4 - core index']
  #allocation1 [shape = 'u32[72,128]{1,0:T(1,128)}', space=vmem, size = 0x9000, scoped, tag = 'internal scratch']
  %s0 = inlined_call_operand.hbm [shape: f32[256,128], index: 0, kind: input, shape index: {}]
  %s1 = inlined_call_operand.hbm [shape: bf16[128,128], index: 1, kind: input, shape index: {}]
  %s2 = inlined_call_operand.vmem [shape: f32[1,128], index: 2, kind: input, shape index: {}]
  %s3 = inlined_call_operand.hbm [shape: bf16[128,128], index: 3, kind: input, shape index: {}]
  %s4 = inlined_call_operand.vmem [shape: f32[1,128], index: 4, kind: input, shape index: {}]
  %s5 = inlined_call_operand.hbm [shape: bf16[128,128], index: 5, kind: input, shape index: {}]
  %s6 = inlined_call_operand.vmem [shape: f32[1,128], index: 6, kind: input, shape index: {}]
  %s7 = inlined_call_operand.hbm [shape: bf16[128,128], index: 7, kind: input, shape index: {}]
  %s8 = inlined_call_operand.vmem [shape: f32[1,128], index: 8, kind: input, shape index: {}]
  %s9 = inlined_call_operand.hbm [shape: f32[256,128], index: 9, kind: output, shape index: {}]
  %s10 = sld [smem:[#allocation0]]
  $region89: #{tpu_custom_call.1} parent=0
    _
  %s12 = ssub.s32 1, %s10
  %s13 = scalar_select 0, %s12, %s10
  $region1: #{tpu_custom_call.1} parent=0
    #allocation2 [shape = 'u8[131072]{0}', space=vmem, size = 0x20000, scoped, tag = 'input window, operand 0']
    #allocation3 [shape = 's32[2]{0}', space=sflag, size = 0x8, scoped, tag = 'scoped memory for tpu_custom_call.1']
    #allocation4 [shape = 's32[2]{0}', space=sflag, size = 0x8, scoped, tag = 'scoped memory for tpu_custom_call.1']
    #allocation5 [shape = 'u8[32768]{0}', space=vmem, size = 0x8000, scoped, tag = 'input window, operand 1, single buffered']
    #allocation6 [shape = 's32[1]{0}', space=sflag, size = 0x4, scoped, tag = 'scoped memory for tpu_custom_call.1']
    #allocation7 [shape = 'u8[32768]{0}', space=vmem, size = 0x8000, scoped, tag = 'input window, operand 3, single buffered']
    #allocation8 [shape = 'u8[32768]{0}', space=vmem, size = 0x8000, scoped, tag = 'input window, operand 5, single buffered']
    #allocation9 [shape = 's32[1]{0}', space=sflag, size = 0x4, scoped, tag = 'scoped memory for tpu_custom_call.1']
    #allocation10 [shape = 'u8[32768]{0}', space=vmem, size = 0x8000, scoped, tag = 'input window, operand 7, single buffered']
    #allocation11 [shape = 'u8[131072]{0}', space=vmem, size = 0x20000, scoped, tag = 'output window, operand 0']
    %14 = vsyncpa [#allocation3], 0
    %s15 = scalar_lea.sflag [#allocation3], 1
    %16 = vsyncpa %s15, 0
    %17 = vsyncpa [#allocation6], 0
    %18 = vsyncpa [#allocation9], 0
    %19 = vsyncpa [#allocation4], 0
    %s20 = scalar_lea.sflag [#allocation4], 1
    %21 = vsyncpa %s20, 0
    loop: start=0, step=1, limit=4
    $region2: #{tpu_custom_call.1} parent=1 // loop_pre_header
      _
    $region3: #{tpu_custom_call.1} parent=1 // loop_header
      %s23 = sphi 0, %s27
      %p24 = scmp.ge.s32.totalorder %s23, 4
      %s33 = sphi 0, %s35
      %s36 = sphi 0, %s33
      %s37 = sphi 0, %s36
      %s53 = sphi 0, %s37
      %s57 = sphi 0, %s57
      %s59 = sphi 0, %s57
      %s60 = sphi 0, %s59
      %s74 = sphi 0, %s60
      %s78 = sphi 0, %s78
      %s80 = sphi 0, %s78
      %s81 = sphi 0, %s80
      %s95 = sphi 0, %s81
      %s99 = sphi 0, %s99
      %s101 = sphi 0, %s99
      %s102 = sphi 0, %s101
      %s116 = sphi 0, %s102
      %s120 = sphi 0, %s120
      %s122 = sphi 0, %s120
      %s123 = sphi 0, %s122
      %s137 = sphi 0, %s123
      %s141 = sphi 0, %s141
      %s143 = sphi 0, %s141
      %s144 = sphi 0, %s143
      %s158 = sphi 0, %s144
      %s162 = sphi 0, %s162
      %s164 = sphi 0, %s162
      %s165 = sphi 0, %s164
      %s179 = sphi 0, %s165
      %s183 = sphi 0, %s183
      %s185 = sphi 0, %s183
      %s186 = sphi 0, %s185
      %s200 = sphi 0, %s186
      %s204 = sphi 0, %s204
      %s206 = sphi 0, %s204
      %s207 = sphi 0, %s206
      %s221 = sphi 0, %s207
      %s227 = sphi 0, %s229
      %s230 = sphi 0, %s227
      %s231 = sphi 0, %s230
      %s247 = sphi 0, %s231
    $region4: #{tpu_custom_call.1} parent=1 // loop_header_branch
      %26 = sbr.rel (%p24) target = $region8
    $region5: #{tpu_custom_call.1} parent=1 // loop_body
      %s28 = ssub.s32 %s23, 1
      %s29 = ssub.s32 %s23, 2
      %s30 = sadd.s32 %s23, 1
      %s31 = ssub.s32 %s23, %s30
      %p32 = scmp.eq.s32.totalorder %s31, 0
      %s34 = sadd.s32 %s33, 1
      %s35 = scalar_select %p32, %s33, %s34
      %p38 = pneg %p32
      %p39 = scmp.eq.s32.totalorder %s23, 1
      %p40 = por %p38, %p39
      %p41 = scmp.ne.s32.totalorder %s33, %s36
      %p42 = scmp.eq.s32.totalorder %s23, 0
      %p43 = por %p41, %p42
      %p44 = scmp.ne.s32.totalorder %s33, %s36
      %p45 = scmp.eq.s32.totalorder %s28, 1
      %p46 = por %p44, %p45
      %p47 = scmp.ne.s32.totalorder %s36, %s37
      %p48 = scmp.eq.s32.totalorder %s28, 0
      %p49 = por %p47, %p48
      %p50 = scmp.ne.s32.totalorder %s36, %s37
      %p51 = scmp.eq.s32.totalorder %s29, 1
      %p52 = por %p50, %p51
      %p54 = scmp.ne.s32.totalorder %s37, %s53
      %p55 = scmp.eq.s32.totalorder %s29, 0
      %p56 = por %p54, %p55
      %s58 = sadd.s32 %s57, 1
      %p61 = scmp.eq.s32.totalorder %s23, 1
      %p62 = scmp.ne.s32.totalorder %s57, %s59
      %p63 = scmp.eq.s32.totalorder %s23, 0
      %p64 = por %p62, %p63
      %p65 = scmp.ne.s32.totalorder %s57, %s59
      %p66 = scmp.eq.s32.totalorder %s28, 1
      %p67 = por %p65, %p66
      %p68 = scmp.ne.s32.totalorder %s59, %s60
      %p69 = scmp.eq.s32.totalorder %s28, 0
      %p70 = por %p68, %p69
      %p71 = scmp.ne.s32.totalorder %s59, %s60
      %p72 = scmp.eq.s32.totalorder %s29, 1
      %p73 = por %p71, %p72
      %p75 = scmp.ne.s32.totalorder %s60, %s74
      %p76 = scmp.eq.s32.totalorder %s29, 0
      %p77 = por %p75, %p76
      %s79 = sadd.s32 %s78, 1
      %p82 = scmp.eq.s32.totalorder %s23, 1
      %p83 = scmp.ne.s32.totalorder %s78, %s80
      %p84 = scmp.eq.s32.totalorder %s23, 0
      %p85 = por %p83, %p84
      %p86 = scmp.ne.s32.totalorder %s78, %s80
      %p87 = scmp.eq.s32.totalorder %s28, 1
      %p88 = por %p86, %p87
      %p89 = scmp.ne.s32.totalorder %s80, %s81
      %p90 = scmp.eq.s32.totalorder %s28, 0
      %p91 = por %p89, %p90
      %p92 = scmp.ne.s32.totalorder %s80, %s81
      %p93 = scmp.eq.s32.totalorder %s29, 1
      %p94 = por %p92, %p93
      %p96 = scmp.ne.s32.totalorder %s81, %s95
      %p97 = scmp.eq.s32.totalorder %s29, 0
      %p98 = por %p96, %p97
      %s100 = sadd.s32 %s99, 1
      %p103 = scmp.eq.s32.totalorder %s23, 1
      %p104 = scmp.ne.s32.totalorder %s99, %s101
      %p105 = scmp.eq.s32.totalorder %s23, 0
      %p106 = por %p104, %p105
      %p107 = scmp.ne.s32.totalorder %s99, %s101
      %p108 = scmp.eq.s32.totalorder %s28, 1
      %p109 = por %p107, %p108
      %p110 = scmp.ne.s32.totalorder %s101, %s102
      %p111 = scmp.eq.s32.totalorder %s28, 0
      %p112 = por %p110, %p111
      %p113 = scmp.ne.s32.totalorder %s101, %s102
      %p114 = scmp.eq.s32.totalorder %s29, 1
      %p115 = por %p113, %p114
      %p117 = scmp.ne.s32.totalorder %s102, %s116
      %p118 = scmp.eq.s32.totalorder %s29, 0
      %p119 = por %p117, %p118
      %s121 = sadd.s32 %s120, 1
      %p124 = scmp.eq.s32.totalorder %s23, 1
      %p125 = scmp.ne.s32.totalorder %s120, %s122
      %p126 = scmp.eq.s32.totalorder %s23, 0
      %p127 = por %p125, %p126
      %p128 = scmp.ne.s32.totalorder %s120, %s122
      %p129 = scmp.eq.s32.totalorder %s28, 1
      %p130 = por %p128, %p129
      %p131 = scmp.ne.s32.totalorder %s122, %s123
      %p132 = scmp.eq.s32.totalorder %s28, 0
      %p133 = por %p131, %p132
      %p134 = scmp.ne.s32.totalorder %s122, %s123
      %p135 = scmp.eq.s32.totalorder %s29, 1
      %p136 = por %p134, %p135
      %p138 = scmp.ne.s32.totalorder %s123, %s137
      %p139 = scmp.eq.s32.totalorder %s29, 0
      %p140 = por %p138, %p139
      %s142 = sadd.s32 %s141, 1
      %p145 = scmp.eq.s32.totalorder %s23, 1
      %p146 = scmp.ne.s32.totalorder %s141, %s143
      %p147 = scmp.eq.s32.totalorder %s23, 0
      %p148 = por %p146, %p147
      %p149 = scmp.ne.s32.totalorder %s141, %s143
      %p150 = scmp.eq.s32.totalorder %s28, 1
      %p151 = por %p149, %p150
      %p152 = scmp.ne.s32.totalorder %s143, %s144
      %p153 = scmp.eq.s32.totalorder %s28, 0
      %p154 = por %p152, %p153
      %p155 = scmp.ne.s32.totalorder %s143, %s144
      %p156 = scmp.eq.s32.totalorder %s29, 1
      %p157 = por %p155, %p156
      %p159 = scmp.ne.s32.totalorder %s144, %s158
      %p160 = scmp.eq.s32.totalorder %s29, 0
      %p161 = por %p159, %p160
      %s163 = sadd.s32 %s162, 1
      %p166 = scmp.eq.s32.totalorder %s23, 1
      %p167 = scmp.ne.s32.totalorder %s162, %s164
      %p168 = scmp.eq.s32.totalorder %s23, 0
      %p169 = por %p167, %p168
      %p170 = scmp.ne.s32.totalorder %s162, %s164
      %p171 = scmp.eq.s32.totalorder %s28, 1
      %p172 = por %p170, %p171
      %p173 = scmp.ne.s32.totalorder %s164, %s165
      %p174 = scmp.eq.s32.totalorder %s28, 0
      %p175 = por %p173, %p174
      %p176 = scmp.ne.s32.totalorder %s164, %s165
      %p177 = scmp.eq.s32.totalorder %s29, 1
      %p178 = por %p176, %p177
      %p180 = scmp.ne.s32.totalorder %s165, %s179
      %p181 = scmp.eq.s32.totalorder %s29, 0
      %p182 = por %p180, %p181
      %s184 = sadd.s32 %s183, 1
      %p187 = scmp.eq.s32.totalorder %s23, 1
      %p188 = scmp.ne.s32.totalorder %s183, %s185
      %p189 = scmp.eq.s32.totalorder %s23, 0
      %p190 = por %p188, %p189
      %p191 = scmp.ne.s32.totalorder %s183, %s185
      %p192 = scmp.eq.s32.totalorder %s28, 1
      %p193 = por %p191, %p192
      %p194 = scmp.ne.s32.totalorder %s185, %s186
      %p195 = scmp.eq.s32.totalorder %s28, 0
      %p196 = por %p194, %p195
      %p197 = scmp.ne.s32.totalorder %s185, %s186
      %p198 = scmp.eq.s32.totalorder %s29, 1
      %p199 = por %p197, %p198
      %p201 = scmp.ne.s32.totalorder %s186, %s200
      %p202 = scmp.eq.s32.totalorder %s29, 0
      %p203 = por %p201, %p202
      %s205 = sadd.s32 %s204, 1
      %p208 = scmp.eq.s32.totalorder %s23, 1
      %p209 = scmp.ne.s32.totalorder %s204, %s206
      %p210 = scmp.eq.s32.totalorder %s23, 0
      %p211 = por %p209, %p210
      %p212 = scmp.ne.s32.totalorder %s204, %s206
      %p213 = scmp.eq.s32.totalorder %s28, 1
      %p214 = por %p212, %p213
      %p215 = scmp.ne.s32.totalorder %s206, %s207
      %p216 = scmp.eq.s32.totalorder %s28, 0
      %p217 = por %p215, %p216
      %p218 = scmp.ne.s32.totalorder %s206, %s207
      %p219 = scmp.eq.s32.totalorder %s29, 1
      %p220 = por %p218, %p219
      %p222 = scmp.ne.s32.totalorder %s207, %s221
      %p223 = scmp.eq.s32.totalorder %s29, 0
      %p224 = por %p222, %p223
      %s225 = ssub.s32 %s23, %s30
      %p226 = scmp.eq.s32.totalorder %s225, 0
      %s228 = sadd.s32 %s227, 1
      %s229 = scalar_select %p226, %s227, %s228
      %p232 = pneg %p226
      %p233 = scmp.eq.s32.totalorder %s23, 1
      %p234 = por %p232, %p233
      %p235 = scmp.ne.s32.totalorder %s227, %s230
      %p236 = scmp.eq.s32.totalorder %s23, 0
      %p237 = por %p235, %p236
      %p238 = scmp.ne.s32.totalorder %s227, %s230
      %p239 = scmp.eq.s32.totalorder %s28, 1
      %p240 = por %p238, %p239
      %p241 = scmp.ne.s32.totalorder %s230, %s231
      %p242 = scmp.eq.s32.totalorder %s28, 0
      %p243 = por %p241, %p242
      %p244 = scmp.ne.s32.totalorder %s230, %s231
      %p245 = scmp.eq.s32.totalorder %s29, 1
      %p246 = por %p244, %p245
      %p248 = scmp.ne.s32.totalorder %s231, %s247
      %p249 = scmp.eq.s32.totalorder %s29, 0
      %p250 = por %p248, %p249
      %p251 = scmp.le.s32.totalorder 1, %s23
      %p252 = scmp.lt.s32.totalorder %s23, 3
      %p253 = pnand %p251, %p252
      %p254 = pneg %p253
      // Predicated region
      $region9: #{tpu_custom_call.1} parent=5 // pred_check
        _
      $region10: #{tpu_custom_call.1} parent=5 // pred_check_branch
        %256 = sbr.rel (%p253) target = $region12
      $region11: #{tpu_custom_call.1} parent=5 // pred_region
        %s257 = ssub.s32 %s23, 1
        // Predicated region
        $region13: #{tpu_custom_call.1} parent=11 // pred_check
          %p258 = pneg %p70
        $region14: #{tpu_custom_call.1} parent=11 // pred_check_branch
          %260 = sbr.rel (%p258) target = $region16
        $region15: #{tpu_custom_call.1} parent=11 // pred_region
          %262 = vsyncadd [#allocation6], 0
          %s263 = sshll.u32 %s1, 4
          %s264 = int_to_ptr.hbm [resolvable:$true] %s263
          %s265 = sshll.u32 [#allocation5], 4
          %s266 = int_to_ptr.vmem [resolvable:$true] %s265
          %271 = dma.hbm_to_vmem [thread:$0]  %s264, 1024, %s266, [#allocation6], 64, 64, 4
        $region16: #{tpu_custom_call.1} parent=11 // pred_fallthru
          _
        // Predicated region
        $region17: #{tpu_custom_call.1} parent=11 // pred_check
          %p272 = pneg %p91
        $region18: #{tpu_custom_call.1} parent=11 // pred_check_branch
          %274 = sbr.rel (%p272) target = $region20
        $region19: #{tpu_custom_call.1} parent=11 // pred_region
          _
        $region20: #{tpu_custom_call.1} parent=11 // pred_fallthru
          _
        // Predicated region
        $region21: #{tpu_custom_call.1} parent=11 // pred_check
          %p275 = pneg %p112
        $region22: #{tpu_custom_call.1} parent=11 // pred_check_branch
          %277 = sbr.rel (%p275) target = $region24
        $region23: #{tpu_custom_call.1} parent=11 // pred_region
          %279 = vsyncadd [#allocation6], 0
          %s280 = sshll.u32 %s3, 4
          %s281 = int_to_ptr.hbm [resolvable:$true] %s280
          %s282 = sshll.u32 [#allocation7], 4
          %s283 = int_to_ptr.vmem [resolvable:$true] %s282
          %288 = dma.hbm_to_vmem [thread:$0]  %s281, 1024, %s283, [#allocation6], 64, 64, 4
        $region24: #{tpu_custom_call.1} parent=11 // pred_fallthru
          _
        // Predicated region
        $region25: #{tpu_custom_call.1} parent=11 // pred_check
          %p289 = pneg %p133
        $region26: #{tpu_custom_call.1} parent=11 // pred_check_branch
          %291 = sbr.rel (%p289) target = $region28
        $region27: #{tpu_custom_call.1} parent=11 // pred_region
          _
        $region28: #{tpu_custom_call.1} parent=11 // pred_fallthru
          _
        // Predicated region
        $region29: #{tpu_custom_call.1} parent=11 // pred_check
          %p292 = pneg %p154
        $region30: #{tpu_custom_call.1} parent=11 // pred_check_branch
          %294 = sbr.rel (%p292) target = $region32
        $region31: #{tpu_custom_call.1} parent=11 // pred_region
          %296 = vsyncadd [#allocation9], 0
          %s297 = sshll.u32 %s5, 4
          %s298 = int_to_ptr.hbm [resolvable:$true] %s297
          %s299 = sshll.u32 [#allocation8], 4
          %s300 = int_to_ptr.vmem [resolvable:$true] %s299
          %305 = dma.hbm_to_vmem [thread:$0]  %s298, 1024, %s300, [#allocation9], 64, 64, 4
        $region32: #{tpu_custom_call.1} parent=11 // pred_fallthru
          _
        // Predicated region
        $region33: #{tpu_custom_call.1} parent=11 // pred_check
          %p306 = pneg %p175
        $region34: #{tpu_custom_call.1} parent=11 // pred_check_branch
          %308 = sbr.rel (%p306) target = $region36
        $region35: #{tpu_custom_call.1} parent=11 // pred_region
          _
        $region36: #{tpu_custom_call.1} parent=11 // pred_fallthru
          _
        // Predicated region
        $region37: #{tpu_custom_call.1} parent=11 // pred_check
          %p309 = pneg %p196
        $region38: #{tpu_custom_call.1} parent=11 // pred_check_branch
          %311 = sbr.rel (%p309) target = $region40
        $region39: #{tpu_custom_call.1} parent=11 // pred_region
          %313 = vsyncadd [#allocation9], 0
          %s314 = sshll.u32 %s7, 4
          %s315 = int_to_ptr.hbm [resolvable:$true] %s314
          %s316 = sshll.u32 [#allocation10], 4
          %s317 = int_to_ptr.vmem [resolvable:$true] %s316
          %322 = dma.hbm_to_vmem [thread:$0]  %s315, 1024, %s317, [#allocation9], 64, 64, 4
        $region40: #{tpu_custom_call.1} parent=11 // pred_fallthru
          _
        // Predicated region
        $region41: #{tpu_custom_call.1} parent=11 // pred_check
          %p323 = pneg %p217
        $region42: #{tpu_custom_call.1} parent=11 // pred_check_branch
          %325 = sbr.rel (%p323) target = $region44
        $region43: #{tpu_custom_call.1} parent=11 // pred_region
          _
        $region44: #{tpu_custom_call.1} parent=11 // pred_fallthru
          _
      $region12: #{tpu_custom_call.1} parent=5 // pred_fallthru
        _
      %p326 = scmp.lt.s32.totalorder %s23, 2
      // Predicated region
      $region45: #{tpu_custom_call.1} parent=5 // pred_check
        %p327 = pneg %p326
      $region46: #{tpu_custom_call.1} parent=5 // pred_check_branch
        %329 = sbr.rel (%p327) target = $region48
      $region47: #{tpu_custom_call.1} parent=5 // pred_region
        // Predicated region
        $region49: #{tpu_custom_call.1} parent=47 // pred_check
          %p330 = pneg %p43
        $region50: #{tpu_custom_call.1} parent=47 // pred_check_branch
          %332 = sbr.rel (%p330) target = $region52
        $region51: #{tpu_custom_call.1} parent=47 // pred_region
          %s333 = sand.u32 %s33, 1
          %s334 = scalar_lea.sflag [#allocation3], %s333
          %s335 = sand.u32 %s33, 1
          %s336 = smul.addr %s335, 128
          %s337 = scalar_lea.vmem [#allocation2], %s336
          %s338 = smul.u32 16, %s23
          %340 = vsyncadd %s334, 0
          %s341 = smul.addr %s338, 8
          %s342 = scalar_lea.hbm %s0, %s341
          %s343 = sshll.u32 %s342, 4
          %s344 = int_to_ptr.hbm [resolvable:$true] %s343
          %s345 = sshll.u32 %s337, 4
          %s346 = int_to_ptr.vmem [resolvable:$true] %s345
          %351 = dma.hbm_to_vmem [thread:$0]  %s344, 2048, %s346, %s334, 128, 128, 8
        $region52: #{tpu_custom_call.1} parent=47 // pred_fallthru
          _
      $region48: #{tpu_custom_call.1} parent=5 // pred_fallthru
        _
      %p352 = scmp.le.s32.totalorder 1, %s23
      %p353 = scmp.lt.s32.totalorder %s23, 3
      %p354 = pnand %p352, %p353
      %p355 = pneg %p354
      // Predicated region
      $region53: #{tpu_custom_call.1} parent=5 // pred_check
        _
      $region54: #{tpu_custom_call.1} parent=5 // pred_check_branch
        %357 = sbr.rel (%p354) target = $region56
      $region55: #{tpu_custom_call.1} parent=5 // pred_region
        %s358 = ssub.s32 %s23, 1
        %s359 = sand.u32 %s36, 1
        %s360 = scalar_lea.sflag [#allocation3], %s359
        %s361 = sand.u32 %s36, 1
        %s362 = smul.addr %s361, 128
        %s363 = scalar_lea.vmem [#allocation2], %s362
        // Predicated region
        $region57: #{tpu_custom_call.1} parent=55 // pred_check
          %p364 = pneg %p49
        $region58: #{tpu_custom_call.1} parent=55 // pred_check_branch
          %366 = sbr.rel (%p364) target = $region60
        $region59: #{tpu_custom_call.1} parent=55 // pred_region
          %368 = dma.done %s360, 2048
        $region60: #{tpu_custom_call.1} parent=55 // pred_fallthru
          _
        // Predicated region
        $region61: #{tpu_custom_call.1} parent=55 // pred_check
          %p369 = pneg %p70
        $region62: #{tpu_custom_call.1} parent=55 // pred_check_branch
          %371 = sbr.rel (%p369) target = $region64
        $region63: #{tpu_custom_call.1} parent=55 // pred_region
          %373 = dma.done [#allocation6], 1024
        $region64: #{tpu_custom_call.1} parent=55 // pred_fallthru
          _
        // Predicated region
        $region65: #{tpu_custom_call.1} parent=55 // pred_check
          %p374 = pneg %p112
        $region66: #{tpu_custom_call.1} parent=55 // pred_check_branch
          %376 = sbr.rel (%p374) target = $region68
        $region67: #{tpu_custom_call.1} parent=55 // pred_region
          %378 = dma.done [#allocation6], 1024
        $region68: #{tpu_custom_call.1} parent=55 // pred_fallthru
          _
        // Predicated region
        $region69: #{tpu_custom_call.1} parent=55 // pred_check
          %p379 = pneg %p154
        $region70: #{tpu_custom_call.1} parent=55 // pred_check_branch
          %381 = sbr.rel (%p379) target = $region72
        $region71: #{tpu_custom_call.1} parent=55 // pred_region
          %383 = dma.done [#allocation9], 1024
        $region72: #{tpu_custom_call.1} parent=55 // pred_fallthru
          _
        // Predicated region
        $region73: #{tpu_custom_call.1} parent=55 // pred_check
          %p384 = pneg %p196
        $region74: #{tpu_custom_call.1} parent=55 // pred_check_branch
          %386 = sbr.rel (%p384) target = $region76
        $region75: #{tpu_custom_call.1} parent=55 // pred_region
          %388 = dma.done [#allocation9], 1024
        $region76: #{tpu_custom_call.1} parent=55 // pred_fallthru
          _
        %s389 = sand.u32 %s36, 1
        %s390 = scalar_lea.sflag [#allocation3], %s389
        %s391 = sand.u32 %s36, 1
        %s392 = smul.addr %s391, 128
        %s393 = scalar_lea.vmem [#allocation2], %s392
        %p394 = pneg %p49
        %p395 = pneg %p46
        %p396 = pneg %p70
        %p397 = pneg %p67
        %p398 = pneg %p91
        %p399 = pneg %p88
        %p400 = pneg %p112
        %p401 = pneg %p109
        %p402 = pneg %p133
        %p403 = pneg %p130
        %p404 = pneg %p154
        %p405 = pneg %p151
        %p406 = pneg %p175
        %p407 = pneg %p172
        %p408 = pneg %p196
        %p409 = pneg %p193
        %p410 = pneg %p217
        %p411 = pneg %p214
        %p412 = pneg %p243
        %p413 = pneg %p240
        %s414 = sand.u32 %s230, 1
        %s415 = scalar_lea.sflag [#allocation4], %s414
        %s416 = sand.u32 %s230, 1
        %s417 = smul.addr %s416, 128
        %s418 = scalar_lea.vmem [#allocation11], %s417
        %s419 = smul.u32 16, %s28
        %s420 = smul.u32 16, %s28
        %v421 = vld [vmem:[%s363] sm:$0xff]
        %v422 = vld [vmem:[%s363 + $0x8] sm:$0xff]
        %v423 = vld [vmem:[%s363 + $0x10] sm:$0xff]
        %v424 = vld [vmem:[%s363 + $0x18] sm:$0xff]
        %v425 = vld [vmem:[%s363 + $0x20] sm:$0xff]
        %v426 = vld [vmem:[%s363 + $0x28] sm:$0xff]
        %v427 = vld [vmem:[%s363 + $0x30] sm:$0xff]
        %v428 = vld [vmem:[%s363 + $0x38] sm:$0xff]
        %v429 = vld [vmem:[%s363 + $0x40] sm:$0xff]
        %v430 = vld [vmem:[%s363 + $0x48] sm:$0xff]
        %v431 = vld [vmem:[%s363 + $0x50] sm:$0xff]
        %v432 = vld [vmem:[%s363 + $0x58] sm:$0xff]
        %v433 = vld [vmem:[%s363 + $0x60] sm:$0xff]
        %v434 = vld [vmem:[%s363 + $0x68] sm:$0xff]
        %v435 = vld [vmem:[%s363 + $0x70] sm:$0xff]
        %v436 = vld [vmem:[%s363 + $0x78] sm:$0xff]
        %v437 = vld [vmem:[#allocation5] sm:$0xf]
        %v438 = vld [vmem:[#allocation5 + $0x4] sm:$0xf]
        %v439 = vld [vmem:[#allocation5 + $0x8] sm:$0xf]
        %v440 = vld [vmem:[#allocation5 + $0xc] sm:$0xf]
        %v441 = vld [vmem:[#allocation5 + $0x10] sm:$0xf]
        %v442 = vld [vmem:[#allocation5 + $0x14] sm:$0xf]
        %v443 = vld [vmem:[#allocation5 + $0x18] sm:$0xf]
        %v444 = vld [vmem:[#allocation5 + $0x1c] sm:$0xf]
        %v445 = vld [vmem:[#allocation5 + $0x20] sm:$0xf]
        %v446 = vld [vmem:[#allocation5 + $0x24] sm:$0xf]
        %v447 = vld [vmem:[#allocation5 + $0x28] sm:$0xf]
        %v448 = vld [vmem:[#allocation5 + $0x2c] sm:$0xf]
        %v449 = vld [vmem:[#allocation5 + $0x30] sm:$0xf]
        %v450 = vld [vmem:[#allocation5 + $0x34] sm:$0xf]
        %v451 = vld [vmem:[#allocation5 + $0x38] sm:$0xf]
        %v452 = vld [vmem:[#allocation5 + $0x3c] sm:$0xf]
        %v453 = vld [vmem:[%s2] sm:$0x1]
        %v454 = vpack.c.bf16 %v422, %v421
        %v455 = vpack.c.bf16 %v424, %v423
        %v456 = vpack.c.bf16 %v426, %v425
        %v457 = vpack.c.bf16 %v428, %v427
        %v458 = vpack.c.bf16 %v430, %v429
        %v459 = vpack.c.bf16 %v432, %v431
        %v460 = vpack.c.bf16 %v434, %v433
        %v461 = vpack.c.bf16 %v436, %v435
        %v463 = vperm.slane %v453, 0
        %v481 = vunpack.c.l.b16 %v437
        %v482 = vunpack.c.l.b16 %v438
        %v483 = vunpack.c.l.b16 %v439
        %v484 = vunpack.c.l.b16 %v440
        %v485 = vunpack.c.l.b16 %v441
        %v486 = vunpack.c.l.b16 %v442
        %v487 = vunpack.c.l.b16 %v443
        %v488 = vunpack.c.l.b16 %v444
        %v489 = vunpack.c.l.b16 %v445
        %v490 = vunpack.c.l.b16 %v446
        %v491 = vunpack.c.l.b16 %v447
        %v492 = vunpack.c.l.b16 %v448
        %v493 = vunpack.c.l.b16 %v449
        %v494 = vunpack.c.l.b16 %v450
        %v495 = vunpack.c.l.b16 %v451
        %v496 = vunpack.c.l.b16 %v452
        %v497 = vpack.c.b16 %v482, %v481
        %v498 = vpack.c.b16 %v484, %v483
        %v499 = vpack.c.b16 %v486, %v485
        %v500 = vpack.c.b16 %v488, %v487
        %v501 = vpack.c.b16 %v490, %v489
        %v502 = vpack.c.b16 %v492, %v491
        %v503 = vpack.c.b16 %v494, %v493
        %v504 = vpack.c.b16 %v496, %v495
        %513 = vmatpush.bf16.msra.mxu0 %v504
        %514 = vmatpush.bf16.msra.mxu0 %v503
        %515 = vmatpush.bf16.msra.mxu0 %v502
        %516 = vmatpush.bf16.msra.mxu0 %v501
        %517 = vmatpush.bf16.msra.mxu0 %v500
        %518 = vmatpush.bf16.msra.mxu0 %v499
        %519 = vmatpush.bf16.msra.mxu0 %v498
        %520 = vmatpush.bf16.msra.mxu0 %v497
        %521 = vmatmul.bf16.gmra.mxu0 %v454
        %v522 = vpop.f32.mrf.mxu0
        %v523 = vadd.f32 %v463, %v522
        %v524 = vpop.f32.mrf.mxu0
        %v525 = vadd.f32 %v463, %v524
        %526 = vmatmul.bf16.gmra.mxu0 %v455
        %v527 = vpop.f32.mrf.mxu0
        %v528 = vadd.f32 %v463, %v527
        %v529 = vpop.f32.mrf.mxu0
        %v530 = vadd.f32 %v463, %v529
        %531 = vmatmul.bf16.gmra.mxu0 %v456
        %v532 = vpop.f32.mrf.mxu0
        %v533 = vadd.f32 %v463, %v532
        %v534 = vpop.f32.mrf.mxu0
        %v535 = vadd.f32 %v463, %v534
        %536 = vmatmul.bf16.gmra.mxu0 %v457
        %v537 = vpop.f32.mrf.mxu0
        %v538 = vadd.f32 %v463, %v537
        %v539 = vpop.f32.mrf.mxu0
        %v540 = vadd.f32 %v463, %v539
        %541 = vmatmul.bf16.gmra.mxu0 %v458
        %v542 = vpop.f32.mrf.mxu0
        %v543 = vadd.f32 %v463, %v542
        %v544 = vpop.f32.mrf.mxu0
        %v545 = vadd.f32 %v463, %v544
        %546 = vmatmul.bf16.gmra.mxu0 %v459
        %v547 = vpop.f32.mrf.mxu0
        %v548 = vadd.f32 %v463, %v547
        %v549 = vpop.f32.mrf.mxu0
        %v550 = vadd.f32 %v463, %v549
        %551 = vmatmul.bf16.gmra.mxu0 %v460
        %v552 = vpop.f32.mrf.mxu0
        %v553 = vadd.f32 %v463, %v552
        %v554 = vpop.f32.mrf.mxu0
        %v555 = vadd.f32 %v463, %v554
        %556 = vmatmul.bf16.gmra.mxu0 %v461
        %v557 = vpop.f32.mrf.mxu0
        %v558 = vadd.f32 %v463, %v557
        %v559 = vpop.f32.mrf.mxu0
        %v560 = vadd.f32 %v463, %v559
        %561 = vdwg.mxu0
        %v562 = vmax.f32 %v523, 0.0
        %v563 = vmax.f32 %v525, 0.0
        %v564 = vmax.f32 %v528, 0.0
        %v565 = vmax.f32 %v530, 0.0
        %v566 = vmax.f32 %v533, 0.0
        %v567 = vmax.f32 %v535, 0.0
        %v568 = vmax.f32 %v538, 0.0
        %v569 = vmax.f32 %v540, 0.0
        %v570 = vmax.f32 %v543, 0.0
        %v571 = vmax.f32 %v545, 0.0
        %v572 = vmax.f32 %v548, 0.0
        %v573 = vmax.f32 %v550, 0.0
        %v574 = vmax.f32 %v553, 0.0
        %v575 = vmax.f32 %v555, 0.0
        %v576 = vmax.f32 %v558, 0.0
        %v577 = vmax.f32 %v560, 0.0
        %v578 = vld [vmem:[#allocation7] sm:$0xf]
        %v579 = vld [vmem:[#allocation7 + $0x4] sm:$0xf]
        %v580 = vld [vmem:[#allocation7 + $0x8] sm:$0xf]
        %v581 = vld [vmem:[#allocation7 + $0xc] sm:$0xf]
        %v582 = vld [vmem:[#allocation7 + $0x10] sm:$0xf]
        %v583 = vld [vmem:[#allocation7 + $0x14] sm:$0xf]
        %v584 = vld [vmem:[#allocation7 + $0x18] sm:$0xf]
        %v585 = vld [vmem:[#allocation7 + $0x1c] sm:$0xf]
        %v586 = vld [vmem:[#allocation7 + $0x20] sm:$0xf]
        %v587 = vld [vmem:[#allocation7 + $0x24] sm:$0xf]
        %v588 = vld [vmem:[#allocation7 + $0x28] sm:$0xf]
        %v589 = vld [vmem:[#allocation7 + $0x2c] sm:$0xf]
        %v590 = vld [vmem:[#allocation7 + $0x30] sm:$0xf]
        %v591 = vld [vmem:[#allocation7 + $0x34] sm:$0xf]
        %v592 = vld [vmem:[#allocation7 + $0x38] sm:$0xf]
        %v593 = vld [vmem:[#allocation7 + $0x3c] sm:$0xf]
        %v594 = vld [vmem:[%s4] sm:$0x1]
        %v595 = vpack.c.bf16 %v563, %v562
        %v596 = vpack.c.bf16 %v565, %v564
        %v597 = vpack.c.bf16 %v567, %v566
        %v598 = vpack.c.bf16 %v569, %v568
        %v599 = vpack.c.bf16 %v571, %v570
        %v600 = vpack.c.bf16 %v573, %v572
        %v601 = vpack.c.bf16 %v575, %v574
        %v602 = vpack.c.bf16 %v577, %v576
        %v604 = vperm.slane %v594, 0
        %v622 = vunpack.c.l.b16 %v578
        %v623 = vunpack.c.l.b16 %v579
        %v624 = vunpack.c.l.b16 %v580
        %v625 = vunpack.c.l.b16 %v581
        %v626 = vunpack.c.l.b16 %v582
        %v627 = vunpack.c.l.b16 %v583
        %v628 = vunpack.c.l.b16 %v584
        %v629 = vunpack.c.l.b16 %v585
        %v630 = vunpack.c.l.b16 %v586
        %v631 = vunpack.c.l.b16 %v587
        %v632 = vunpack.c.l.b16 %v588
        %v633 = vunpack.c.l.b16 %v589
        %v634 = vunpack.c.l.b16 %v590
        %v635 = vunpack.c.l.b16 %v591
        %v636 = vunpack.c.l.b16 %v592
        %v637 = vunpack.c.l.b16 %v593
        %v638 = vpack.c.b16 %v623, %v622
        %v639 = vpack.c.b16 %v625, %v624
        %v640 = vpack.c.b16 %v627, %v626
        %v641 = vpack.c.b16 %v629, %v628
        %v642 = vpack.c.b16 %v631, %v630
        %v643 = vpack.c.b16 %v633, %v632
        %v644 = vpack.c.b16 %v635, %v634
        %v645 = vpack.c.b16 %v637, %v636
        %654 = vmatpush.bf16.msra.mxu0 %v645
        %655 = vmatpush.bf16.msra.mxu0 %v644
        %656 = vmatpush.bf16.msra.mxu0 %v643
        %657 = vmatpush.bf16.msra.mxu0 %v642
        %658 = vmatpush.bf16.msra.mxu0 %v641
        %659 = vmatpush.bf16.msra.mxu0 %v640
        %660 = vmatpush.bf16.msra.mxu0 %v639
        %661 = vmatpush.bf16.msra.mxu0 %v638
        %662 = vmatmul.bf16.gmra.mxu0 %v595
        %v663 = vpop.f32.mrf.mxu0
        %v664 = vadd.f32 %v604, %v663
        %v665 = vpop.f32.mrf.mxu0
        %v666 = vadd.f32 %v604, %v665
        %667 = vmatmul.bf16.gmra.mxu0 %v596
        %v668 = vpop.f32.mrf.mxu0
        %v669 = vadd.f32 %v604, %v668
        %v670 = vpop.f32.mrf.mxu0
        %v671 = vadd.f32 %v604, %v670
        %672 = vmatmul.bf16.gmra.mxu0 %v597
        %v673 = vpop.f32.mrf.mxu0
        %v674 = vadd.f32 %v604, %v673
        %v675 = vpop.f32.mrf.mxu0
        %v676 = vadd.f32 %v604, %v675
        %677 = vmatmul.bf16.gmra.mxu0 %v598
        %v678 = vpop.f32.mrf.mxu0
        %v679 = vadd.f32 %v604, %v678
        %v680 = vpop.f32.mrf.mxu0
        %v681 = vadd.f32 %v604, %v680
        %682 = vmatmul.bf16.gmra.mxu0 %v599
        %v683 = vpop.f32.mrf.mxu0
        %v684 = vadd.f32 %v604, %v683
        %v685 = vpop.f32.mrf.mxu0
        %v686 = vadd.f32 %v604, %v685
        %687 = vmatmul.bf16.gmra.mxu0 %v600
        %v688 = vpop.f32.mrf.mxu0
        %v689 = vadd.f32 %v604, %v688
        %v690 = vpop.f32.mrf.mxu0
        %v691 = vadd.f32 %v604, %v690
        %692 = vmatmul.bf16.gmra.mxu0 %v601
        %v693 = vpop.f32.mrf.mxu0
        %v694 = vadd.f32 %v604, %v693
        %v695 = vpop.f32.mrf.mxu0
        %v696 = vadd.f32 %v604, %v695
        %697 = vmatmul.bf16.gmra.mxu0 %v602
        %v698 = vpop.f32.mrf.mxu0
        %v699 = vadd.f32 %v604, %v698
        %v700 = vpop.f32.mrf.mxu0
        %v701 = vadd.f32 %v604, %v700
        %702 = vdwg.mxu0
        %v703 = vmax.f32 %v664, 0.0
        %v704 = vmax.f32 %v666, 0.0
        %v705 = vmax.f32 %v669, 0.0
        %v706 = vmax.f32 %v671, 0.0
        %v707 = vmax.f32 %v674, 0.0
        %v708 = vmax.f32 %v676, 0.0
        %v709 = vmax.f32 %v679, 0.0
        %v710 = vmax.f32 %v681, 0.0
        %v711 = vmax.f32 %v684, 0.0
        %v712 = vmax.f32 %v686, 0.0
        %v713 = vmax.f32 %v689, 0.0
        %v714 = vmax.f32 %v691, 0.0
        %v715 = vmax.f32 %v694, 0.0
        %v716 = vmax.f32 %v696, 0.0
        %v717 = vmax.f32 %v699, 0.0
        %v718 = vmax.f32 %v701, 0.0
        %v719 = vld [vmem:[#allocation8] sm:$0xf]
        %v720 = vld [vmem:[#allocation8 + $0x4] sm:$0xf]
        %v721 = vld [vmem:[#allocation8 + $0x8] sm:$0xf]
        %v722 = vld [vmem:[#allocation8 + $0xc] sm:$0xf]
        %v723 = vld [vmem:[#allocation8 + $0x10] sm:$0xf]
        %v724 = vld [vmem:[#allocation8 + $0x14] sm:$0xf]
        %v725 = vld [vmem:[#allocation8 + $0x18] sm:$0xf]
        %v726 = vld [vmem:[#allocation8 + $0x1c] sm:$0xf]
        %v727 = vld [vmem:[#allocation8 + $0x20] sm:$0xf]
        %v728 = vld [vmem:[#allocation8 + $0x24] sm:$0xf]
        %v729 = vld [vmem:[#allocation8 + $0x28] sm:$0xf]
        %v730 = vld [vmem:[#allocation8 + $0x2c] sm:$0xf]
        %v731 = vld [vmem:[#allocation8 + $0x30] sm:$0xf]
        %v732 = vld [vmem:[#allocation8 + $0x34] sm:$0xf]
        %v733 = vld [vmem:[#allocation8 + $0x38] sm:$0xf]
        %v734 = vld [vmem:[#allocation8 + $0x3c] sm:$0xf]
        %v735 = vld [vmem:[%s6] sm:$0x1]
        %v736 = vpack.c.bf16 %v704, %v703
        %v737 = vpack.c.bf16 %v706, %v705
        %v738 = vpack.c.bf16 %v708, %v707
        %v739 = vpack.c.bf16 %v710, %v709
        %v740 = vpack.c.bf16 %v712, %v711
        %v741 = vpack.c.bf16 %v714, %v713
        %v742 = vpack.c.bf16 %v716, %v715
        %v743 = vpack.c.bf16 %v718, %v717
        %v745 = vperm.slane %v735, 0
        %v763 = vunpack.c.l.b16 %v719
        %v764 = vunpack.c.l.b16 %v720
        %v765 = vunpack.c.l.b16 %v721
        %v766 = vunpack.c.l.b16 %v722
        %v767 = vunpack.c.l.b16 %v723
        %v768 = vunpack.c.l.b16 %v724
        %v769 = vunpack.c.l.b16 %v725
        %v770 = vunpack.c.l.b16 %v726
        %v771 = vunpack.c.l.b16 %v727
        %v772 = vunpack.c.l.b16 %v728
        %v773 = vunpack.c.l.b16 %v729
        %v774 = vunpack.c.l.b16 %v730
        %v775 = vunpack.c.l.b16 %v731
        %v776 = vunpack.c.l.b16 %v732
        %v777 = vunpack.c.l.b16 %v733
        %v778 = vunpack.c.l.b16 %v734
        %v779 = vpack.c.b16 %v764, %v763
        %v780 = vpack.c.b16 %v766, %v765
        %v781 = vpack.c.b16 %v768, %v767
        %v782 = vpack.c.b16 %v770, %v769
        %v783 = vpack.c.b16 %v772, %v771
        %v784 = vpack.c.b16 %v774, %v773
        %v785 = vpack.c.b16 %v776, %v775
        %v786 = vpack.c.b16 %v778, %v777
        %795 = vmatpush.bf16.msra.mxu0 %v786
        %796 = vmatpush.bf16.msra.mxu0 %v785
        %797 = vmatpush.bf16.msra.mxu0 %v784
        %798 = vmatpush.bf16.msra.mxu0 %v783
        %799 = vmatpush.bf16.msra.mxu0 %v782
        %800 = vmatpush.bf16.msra.mxu0 %v781
        %801 = vmatpush.bf16.msra.mxu0 %v780
        %802 = vmatpush.bf16.msra.mxu0 %v779
        %803 = vmatmul.bf16.gmra.mxu0 %v736
        %v804 = vpop.f32.mrf.mxu0
        %v805 = vadd.f32 %v745, %v804
        %v806 = vpop.f32.mrf.mxu0
        %v807 = vadd.f32 %v745, %v806
        %808 = vmatmul.bf16.gmra.mxu0 %v737
        %v809 = vpop.f32.mrf.mxu0
        %v810 = vadd.f32 %v745, %v809
        %v811 = vpop.f32.mrf.mxu0
        %v812 = vadd.f32 %v745, %v811
        %813 = vmatmul.bf16.gmra.mxu0 %v738
        %v814 = vpop.f32.mrf.mxu0
        %v815 = vadd.f32 %v745, %v814
        %v816 = vpop.f32.mrf.mxu0
        %v817 = vadd.f32 %v745, %v816
        %818 = vmatmul.bf16.gmra.mxu0 %v739
        %v819 = vpop.f32.mrf.mxu0
        %v820 = vadd.f32 %v745, %v819
        %v821 = vpop.f32.mrf.mxu0
        %v822 = vadd.f32 %v745, %v821
        %823 = vmatmul.bf16.gmra.mxu0 %v740
        %v824 = vpop.f32.mrf.mxu0
        %v825 = vadd.f32 %v745, %v824
        %v826 = vpop.f32.mrf.mxu0
        %v827 = vadd.f32 %v745, %v826
        %828 = vmatmul.bf16.gmra.mxu0 %v741
        %v829 = vpop.f32.mrf.mxu0
        %v830 = vadd.f32 %v745, %v829
        %v831 = vpop.f32.mrf.mxu0
        %v832 = vadd.f32 %v745, %v831
        %833 = vmatmul.bf16.gmra.mxu0 %v742
        %v834 = vpop.f32.mrf.mxu0
        %v835 = vadd.f32 %v745, %v834
        %v836 = vpop.f32.mrf.mxu0
        %v837 = vadd.f32 %v745, %v836
        %838 = vmatmul.bf16.gmra.mxu0 %v743
        %v839 = vpop.f32.mrf.mxu0
        %v840 = vadd.f32 %v745, %v839
        %v841 = vpop.f32.mrf.mxu0
        %v842 = vadd.f32 %v745, %v841
        %843 = vdwg.mxu0
        %v844 = vmax.f32 %v805, 0.0
        %v845 = vmax.f32 %v807, 0.0
        %v846 = vmax.f32 %v810, 0.0
        %v847 = vmax.f32 %v812, 0.0
        %v848 = vmax.f32 %v815, 0.0
        %v849 = vmax.f32 %v817, 0.0
        %v850 = vmax.f32 %v820, 0.0
        %v851 = vmax.f32 %v822, 0.0
        %v852 = vmax.f32 %v825, 0.0
        %v853 = vmax.f32 %v827, 0.0
        %v854 = vmax.f32 %v830, 0.0
        %v855 = vmax.f32 %v832, 0.0
        %v856 = vmax.f32 %v835, 0.0
        %v857 = vmax.f32 %v837, 0.0
        %v858 = vmax.f32 %v840, 0.0
        %v859 = vmax.f32 %v842, 0.0
        %v860 = vld [vmem:[#allocation10] sm:$0xf]
        %v861 = vld [vmem:[#allocation10 + $0x4] sm:$0xf]
        %v862 = vld [vmem:[#allocation10 + $0x8] sm:$0xf]
        %v863 = vld [vmem:[#allocation10 + $0xc] sm:$0xf]
        %v864 = vld [vmem:[#allocation10 + $0x10] sm:$0xf]
        %v865 = vld [vmem:[#allocation10 + $0x14] sm:$0xf]
        %v866 = vld [vmem:[#allocation10 + $0x18] sm:$0xf]
        %v867 = vld [vmem:[#allocation10 + $0x1c] sm:$0xf]
        %v868 = vld [vmem:[#allocation10 + $0x20] sm:$0xf]
        %v869 = vld [vmem:[#allocation10 + $0x24] sm:$0xf]
        %v870 = vld [vmem:[#allocation10 + $0x28] sm:$0xf]
        %v871 = vld [vmem:[#allocation10 + $0x2c] sm:$0xf]
        %v872 = vld [vmem:[#allocation10 + $0x30] sm:$0xf]
        %v873 = vld [vmem:[#allocation10 + $0x34] sm:$0xf]
        %v874 = vld [vmem:[#allocation10 + $0x38] sm:$0xf]
        %v875 = vld [vmem:[#allocation10 + $0x3c] sm:$0xf]
        %v876 = vld [vmem:[%s8] sm:$0x1]
        %v877 = vpack.c.bf16 %v845, %v844
        %v878 = vpack.c.bf16 %v847, %v846
        %v879 = vpack.c.bf16 %v849, %v848
        %v880 = vpack.c.bf16 %v851, %v850
        %v881 = vpack.c.bf16 %v853, %v852
        %v882 = vpack.c.bf16 %v855, %v854
        %v883 = vpack.c.bf16 %v857, %v856
        %v884 = vpack.c.bf16 %v859, %v858
        %v886 = vperm.slane %v876, 0
        %v904 = vunpack.c.l.b16 %v860
        %v905 = vunpack.c.l.b16 %v861
        %v906 = vunpack.c.l.b16 %v862
        %v907 = vunpack.c.l.b16 %v863
        %v908 = vunpack.c.l.b16 %v864
        %v909 = vunpack.c.l.b16 %v865
        %v910 = vunpack.c.l.b16 %v866
        %v911 = vunpack.c.l.b16 %v867
        %v912 = vunpack.c.l.b16 %v868
        %v913 = vunpack.c.l.b16 %v869
        %v914 = vunpack.c.l.b16 %v870
        %v915 = vunpack.c.l.b16 %v871
        %v916 = vunpack.c.l.b16 %v872
        %v917 = vunpack.c.l.b16 %v873
        %v918 = vunpack.c.l.b16 %v874
        %v919 = vunpack.c.l.b16 %v875
        %v920 = vpack.c.b16 %v905, %v904
        %v921 = vpack.c.b16 %v907, %v906
        %v922 = vpack.c.b16 %v909, %v908
        %v923 = vpack.c.b16 %v911, %v910
        %v924 = vpack.c.b16 %v913, %v912
        %v925 = vpack.c.b16 %v915, %v914
        %v926 = vpack.c.b16 %v917, %v916
        %v927 = vpack.c.b16 %v919, %v918
        %936 = vmatpush.bf16.msra.mxu0 %v927
        %937 = vmatpush.bf16.msra.mxu0 %v926
        %938 = vmatpush.bf16.msra.mxu0 %v925
        %939 = vmatpush.bf16.msra.mxu0 %v924
        %940 = vmatpush.bf16.msra.mxu0 %v923
        %941 = vmatpush.bf16.msra.mxu0 %v922
        %942 = vmatpush.bf16.msra.mxu0 %v921
        %943 = vmatpush.bf16.msra.mxu0 %v920
        %944 = vmatmul.bf16.gmra.mxu0 %v877
        %v945 = vpop.f32.mrf.mxu0
        %v946 = vadd.f32 %v886, %v945
        %v947 = vpop.f32.mrf.mxu0
        %v948 = vadd.f32 %v886, %v947
        %949 = vmatmul.bf16.gmra.mxu0 %v878
        %v950 = vpop.f32.mrf.mxu0
        %v951 = vadd.f32 %v886, %v950
        %v952 = vpop.f32.mrf.mxu0
        %v953 = vadd.f32 %v886, %v952
        %954 = vmatmul.bf16.gmra.mxu0 %v879
        %v955 = vpop.f32.mrf.mxu0
        %v956 = vadd.f32 %v886, %v955
        %v957 = vpop.f32.mrf.mxu0
        %v958 = vadd.f32 %v886, %v957
        %959 = vmatmul.bf16.gmra.mxu0 %v880
        %v960 = vpop.f32.mrf.mxu0
        %v961 = vadd.f32 %v886, %v960
        %v962 = vpop.f32.mrf.mxu0
        %v963 = vadd.f32 %v886, %v962
        %964 = vmatmul.bf16.gmra.mxu0 %v881
        %v965 = vpop.f32.mrf.mxu0
        %v966 = vadd.f32 %v886, %v965
        %v967 = vpop.f32.mrf.mxu0
        %v968 = vadd.f32 %v886, %v967
        %969 = vmatmul.bf16.gmra.mxu0 %v882
        %v970 = vpop.f32.mrf.mxu0
        %v971 = vadd.f32 %v886, %v970
        %v972 = vpop.f32.mrf.mxu0
        %v973 = vadd.f32 %v886, %v972
        %974 = vmatmul.bf16.gmra.mxu0 %v883
        %v975 = vpop.f32.mrf.mxu0
        %v976 = vadd.f32 %v886, %v975
        %v977 = vpop.f32.mrf.mxu0
        %v978 = vadd.f32 %v886, %v977
        %979 = vmatmul.bf16.gmra.mxu0 %v884
        %v980 = vpop.f32.mrf.mxu0
        %v981 = vadd.f32 %v886, %v980
        %v982 = vpop.f32.mrf.mxu0
        %v983 = vadd.f32 %v886, %v982
        %984 = vdwg.mxu0
        %985 = vst [vmem:[%s418] sm:$0xff] %v946
        %986 = vst [vmem:[%s418 + $0x8] sm:$0xff] %v948
        %987 = vst [vmem:[%s418 + $0x10] sm:$0xff] %v951
        %988 = vst [vmem:[%s418 + $0x18] sm:$0xff] %v953
        %989 = vst [vmem:[%s418 + $0x20] sm:$0xff] %v956
        %990 = vst [vmem:[%s418 + $0x28] sm:$0xff] %v958
        %991 = vst [vmem:[%s418 + $0x30] sm:$0xff] %v961
        %992 = vst [vmem:[%s418 + $0x38] sm:$0xff] %v963
        %993 = vst [vmem:[%s418 + $0x40] sm:$0xff] %v966
        %994 = vst [vmem:[%s418 + $0x48] sm:$0xff] %v968
        %995 = vst [vmem:[%s418 + $0x50] sm:$0xff] %v971
        %996 = vst [vmem:[%s418 + $0x58] sm:$0xff] %v973
        %997 = vst [vmem:[%s418 + $0x60] sm:$0xff] %v976
        %998 = vst [vmem:[%s418 + $0x68] sm:$0xff] %v978
        %999 = vst [vmem:[%s418 + $0x70] sm:$0xff] %v981
        %1000 = vst [vmem:[%s418 + $0x78] sm:$0xff] %v983
        %s1001 = sand.u32 %s230, 1
        %s1002 = scalar_lea.sflag [#allocation4], %s1001
        %s1003 = sand.u32 %s230, 1
        %s1004 = smul.addr %s1003, 128
        %s1005 = scalar_lea.vmem [#allocation11], %s1004
        // Predicated region
        $region77: #{tpu_custom_call.1} parent=55 // pred_check
          %p1006 = pneg %p240
        $region78: #{tpu_custom_call.1} parent=55 // pred_check_branch
          %1008 = sbr.rel (%p1006) target = $region80
        $region79: #{tpu_custom_call.1} parent=55 // pred_region
          %s1009 = smul.u32 16, %s28
          %1011 = vsyncadd %s1002, 0
          %s1012 = smul.addr %s1009, 8
          %s1013 = scalar_lea.hbm %s9, %s1012
          %s1014 = sshll.u32 %s1005, 4
          %s1015 = int_to_ptr.vmem [resolvable:$true] %s1014
          %s1016 = sshll.u32 %s1013, 4
          %s1017 = int_to_ptr.hbm [resolvable:$true] %s1016
          %1022 = dma.vmem_to_hbm [thread:$0]  %s1015, 2048, %s1017, %s1002, 128, 128, 8
        $region80: #{tpu_custom_call.1} parent=55 // pred_fallthru
          _
      $region56: #{tpu_custom_call.1} parent=5 // pred_fallthru
        _
      %p1023 = scmp.le.s32.totalorder 2, %s23
      // Predicated region
      $region81: #{tpu_custom_call.1} parent=5 // pred_check
        %p1024 = pneg %p1023
      $region82: #{tpu_custom_call.1} parent=5 // pred_check_branch
        %1026 = sbr.rel (%p1024) target = $region84
      $region83: #{tpu_custom_call.1} parent=5 // pred_region
        %s1027 = ssub.s32 %s23, 2
        // Predicated region
        $region85: #{tpu_custom_call.1} parent=83 // pred_check
          %p1028 = pneg %p246
        $region86: #{tpu_custom_call.1} parent=83 // pred_check_branch
          %1030 = sbr.rel (%p1028) target = $region88
        $region87: #{tpu_custom_call.1} parent=83 // pred_region
          %s1031 = sand.u32 %s231, 1
          %s1032 = scalar_lea.sflag [#allocation4], %s1031
          %s1033 = sand.u32 %s231, 1
          %s1034 = smul.addr %s1033, 128
          %s1035 = scalar_lea.vmem [#allocation11], %s1034
          %1037 = dma.done %s1032, 2048
        $region88: #{tpu_custom_call.1} parent=83 // pred_fallthru
          _
      $region84: #{tpu_custom_call.1} parent=5 // pred_fallthru
        _
    $region6: #{tpu_custom_call.1} parent=1 // loop_footer
      %s27 = sadd.s32 1, %s23
    $region7: #{tpu_custom_call.1} parent=1 // loop_footer_branch
      %22 = sbr.rel target = $region3
    $region8: #{tpu_custom_call.1} parent=1 // loop_exit
      _
    %1038 = vsyncpa [#allocation3], 1
    %s1039 = scalar_lea.sflag [#allocation3], 1
    %1040 = vsyncpa %s1039, 1
    %1041 = vsyncpa [#allocation6], 1
    %1042 = vsyncpa [#allocation9], 1
    %1043 = vsyncpa [#allocation4], 1
    %s1044 = scalar_lea.sflag [#allocation4], 1
    %1045 = vsyncpa %s1044, 1

</llo_original>
